<compile_context>
chip_gen: v5e
topology: v5e:2x2
jax: 0.10.0
libtpu: 0.0.40
codegen_flags: <defaults>
</compile_context>

<pallas_src>
import functools

import jax
import jax.numpy as jnp
from jax.experimental import pallas as pl
from jax.experimental.pallas import tpu as pltpu


def _round_up(n, m):
    return -(-n // m) * m


def _choose_time_tile(T, halo, max_ch):
    """Largest multiple-of-8 time tile whose live (T_tile+halo, max_ch) f32
    intermediates stay well inside the smallest scoped-VMEM budget we target
    (v5e: 16 MiB default scoped; v7x: 32 MiB scoped of 64 MiB physical)."""
    budget = 6 * 1024 * 1024                       # bytes for live activations
    bytes_per_row = 4 * max(int(max_ch), 1)
    cap = (budget // (3 * bytes_per_row)) - halo   # ~3 live slabs of that width
    cap = max(8, (cap // 8) * 8)
    return max(8, min(_round_up(T, 8), 512, cap))


def _const_index_map(ndim):
    def index_map(b, t):
        return (0,) * ndim
    return index_map


# ----------------------------------------------------------------------------
# Fused kernel: the whole causal-conv stack for one (batch, time-tile) block.
#
# x_ref      : (1, halo + T_ceil, C_in)  causally left-padded input.  Its
#              index_map is constant along the time-tile axis, so it is DMA'd
#              once per batch element and re-used across tiles.
# per layer l: w_ref (K, C_in_l, C_out_l), b_ref (1, C_out_l), a_ref (1, C_out_l)
# o_ref      : (1, T_tile, 3)
# ----------------------------------------------------------------------------
def fused_cnn1d_kernel(x_ref, *refs, layer_meta, t_tile, halo,
                       intermediate_dtype):
    o_ref = refs[-1]
    prm = refs[:-1]

    # Start of this tile's receptive field inside the left-padded input.
    t0 = pl.multiple_of(pl.program_id(1) * t_tile, 8)
    h = x_ref[0, pl.ds(t0, t_tile + halo), :].astype(jnp.float32)

    rem = halo                                     # halo rows still carried
    n_layers = len(layer_meta)
    for li, (K, dil, act) in enumerate(layer_meta):
        w_ref, b_ref, a_ref = prm[3 * li], prm[3 * li + 1], prm[3 * li + 2]
        rem -= (K - 1) * dil
        rows = t_tile + rem                        # valid rows after this layer
        c_out = w_ref.shape[2]

        # Causal conv as K unrolled taps accumulating into an f32 value.  Each
        # tap is a (rows, C_in) @ (C_in, C_out) MXU matmul; at production
        # channel widths the contraction already fills the MXU depth.
        acc = jnp.zeros((rows, c_out), jnp.float32)
        for j in range(K):
            acc += jnp.dot(h[j * dil:j * dil + rows, :], w_ref[j],
                           preferred_element_type=jnp.float32)
        acc += b_ref[...]

        if act == "prelu":
            acc = jnp.where(acc >= 0.0, acc, a_ref[...] * acc)
        else:                                      # "tanh"
            acc = jnp.tanh(acc)

        if li + 1 < n_layers:
            # Reproduce CausConv1d's per-layer zero left-padding: rows of this
            # intermediate that correspond to sequence time < 0 must be zero
            # before the next layer consumes them.
            row_id = jax.lax.broadcasted_iota(jnp.int32, (rows, 1), 0)
            acc = jnp.where(row_id < (rem - t0), 0.0, acc)
            h = acc.astype(intermediate_dtype)     # stays in VMEM / vregs
        else:
            # Final layer: rows == t_tile, all rows are valid output times.
            o_ref[0] = acc.astype(o_ref.dtype)


# ----------------------------------------------------------------------------
# Wrapper: parameter re-layout, single causal pad, tiling, pallas_call.
# ----------------------------------------------------------------------------
def cnn1d_forward(x, params, *, in_deep, md_deep, out_conv_dilation,
                  t_tile=None, intermediate_dtype=jnp.float32):
    """x: (B, input_ch, T) (PyTorch NCW) -> (B, T, 3), i.e. the torch output
    after its final transpose(1, 2).

    intermediate_dtype: dtype holding inter-layer activations inside the kernel
    (jnp.bfloat16 halves their VMEM footprint on v6e/v7x; keep float32 on v5e).
    """
    B, C_in, T = x.shape

    # ---- assemble the fused layer stack (all glue is plain JAX) -------------
    layer_arrays, layer_meta = [], []

    def add_layer(w, b, alpha, dilation, act):
        c_out, _, K = w.shape
        # (C_out, C_in, K) torch layout -> (K, C_in, C_out) tap-major.
        layer_arrays.append(jnp.transpose(w, (2, 1, 0)).astype(jnp.float32))
        layer_arrays.append(jnp.asarray(b, jnp.float32).reshape(1, c_out))
        layer_arrays.append(jnp.broadcast_to(
            jnp.asarray(alpha, jnp.float32).reshape(1, -1),
            (1, c_out)).astype(jnp.float32))
        layer_meta.append((int(K), int(dilation), act))

    for i in range(in_deep):
        add_layer(params[f"in_w{i}"], params[f"in_b{i}"], params[f"in_a{i}"],
                  1, "prelu")
    for i in range(md_deep):
        add_layer(params[f"md_w{i}"], params[f"md_b{i}"], params[f"md_a{i}"],
                  1, "prelu")
    add_layer(params["out1_w"], params["out1_b"], params["out_a"],
              out_conv_dilation, "prelu")
    add_layer(params["out2_w"], params["out2_b"],
              jnp.zeros((3,), jnp.float32), out_conv_dilation, "tanh")

    halo = sum((K - 1) * d for (K, d, _) in layer_meta)
    max_ch = max(max(w.shape[1], w.shape[2]) for w in layer_arrays[0::3])
    if t_tile is None:
        t_tile = _choose_time_tile(T, halo, max_ch)
    n_t = -(-T // t_tile)
    T_ceil = n_t * t_tile

    # One causal left-pad of the *raw* C_in-channel input (plus right-pad to a
    # whole number of time tiles) replaces the per-layer activation pads of the
    # unfused version.
    x_btc = jnp.transpose(x, (0, 2, 1)).astype(jnp.float32)    # (B, T, C_in)
    x_pad = jnp.pad(x_btc, ((0, 0), (halo, T_ceil - T), (0, 0)))

    # TODO(synk): for very long sequences, window the input DMA itself
    # (Element-indexed halo or a manual make_async_copy) instead of staging the
    # full padded time axis per batch element; with small C_in this block is
    # cheap and is DMA'd only once per batch element.
    in_specs = [pl.BlockSpec((1, halo + T_ceil, C_in), lambda b, t: (b, 0, 0))]
    for arr in layer_arrays:   # weights/bias/slopes stay resident in VMEM
        in_specs.append(pl.BlockSpec(arr.shape, _const_index_map(arr.ndim)))

    kernel = functools.partial(
        fused_cnn1d_kernel, layer_meta=tuple(layer_meta), t_tile=t_tile,
        halo=halo, intermediate_dtype=intermediate_dtype)

    out = pl.pallas_call(
        kernel,
        out_shape=jax.ShapeDtypeStruct((B, T_ceil, 3), jnp.float32),
        grid=(B, n_t),
        in_specs=in_specs,
        out_specs=pl.BlockSpec((1, t_tile, 3), lambda b, t: (b, t, 0)),
        compiler_params=pltpu.CompilerParams(
            dimension_semantics=("parallel", "parallel")),
    )(x_pad, *layer_arrays)

    return out[:, :T, :]


# ----------------------------------------------------------------------------
# Parameter init (matches the PyTorch module structure).
# ----------------------------------------------------------------------------
def init_cnn1d_params(key, *, input_ch, in_deep, in_krnl_sz, in_nb_ch,
                      md_deep, md_krnl_sz, md_nb_ch, out_conv_len, out_nbh):
    params = {}
    n_keys = 2 * (in_deep + md_deep) + 4
    keys = iter(jax.random.split(key, n_keys))

    def conv_init(k_w, k_b, c_out, c_in, ksz):
        w = 0.1 * jax.random.normal(k_w, (c_out, c_in, ksz), jnp.float32)
        b = 0.1 * jax.random.normal(k_b, (c_out,), jnp.float32)
        return w, b

    for i in range(in_deep):
        c_in = input_ch if i == 0 else in_nb_ch
        w, b = conv_init(next(keys), next(keys), in_nb_ch, c_in, in_krnl_sz)
        params[f"in_w{i}"], params[f"in_b{i}"] = w, b
        params[f"in_a{i}"] = jnp.full((in_nb_ch,), 0.25, jnp.float32)  # PReLU

    for i in range(md_deep):
        c_in = in_nb_ch if i == 0 else md_nb_ch
        w, b = conv_init(next(keys), next(keys), md_nb_ch, c_in, md_krnl_sz)
        params[f"md_w{i}"], params[f"md_b{i}"] = w, b
        params[f"md_a{i}"] = jnp.full((md_nb_ch,), 0.25, jnp.float32)

    params["out1_w"], params["out1_b"] = conv_init(
        next(keys), next(keys), out_nbh, md_nb_ch, out_conv_len)
    params["out_a"] = jnp.float32(0.25)            # nn.PReLU() single parameter
    params["out2_w"], params["out2_b"] = conv_init(
        next(keys), next(keys), 3, out_nbh, out_conv_len)
    return params


# ----------------------------------------------------------------------------
# Pure-JAX (unfused) reference for correctness checking.
# ----------------------------------------------------------------------------
def _caus_conv1d_ref(x_btc, w, b, dilation):
    c_out, _, K = w.shape
    pad = (K - 1) * dilation
    T = x_btc.shape[1]
    xp = jnp.pad(x_btc, ((0, 0), (pad, 0), (0, 0)))
    y = jnp.zeros((x_btc.shape[0], T, c_out), jnp.float32)
    for j in range(K):
        y = y + jnp.einsum("btc,oc->bto",
                           xp[:, j * dilation:j * dilation + T, :],
                           w[:, :, j], precision=jax.lax.Precision.HIGHEST)
    return y + b.reshape(1, 1, c_out)


def cnn1d_reference(x, params, *, in_deep, md_deep, out_conv_dilation):
    h = jnp.transpose(x, (0, 2, 1)).astype(jnp.float32)
    for i in range(in_deep):
        y = _caus_conv1d_ref(h, params[f"in_w{i}"], params[f"in_b{i}"], 1)
        a = params[f"in_a{i}"].reshape(1, 1, -1)
        h = jnp.where(y >= 0, y, a * y)
    for i in range(md_deep):
        y = _caus_conv1d_ref(h, params[f"md_w{i}"], params[f"md_b{i}"], 1)
        a = params[f"md_a{i}"].reshape(1, 1, -1)
        h = jnp.where(y >= 0, y, a * y)
    y = _caus_conv1d_ref(h, params["out1_w"], params["out1_b"],
                         out_conv_dilation)
    h = jnp.where(y >= 0, y, params["out_a"] * y)
    y = _caus_conv1d_ref(h, params["out2_w"], params["out2_b"],
                         out_conv_dilation)
    return jnp.tanh(y)


if __name__ == "__main__":
    # Small, module-consistent configuration.
    B, T = 2, 16
    cfg = dict(input_ch=4, in_deep=1, in_krnl_sz=5, in_nb_ch=32,
               md_deep=2, md_krnl_sz=5, md_nb_ch=32,
               out_conv_len=5, out_conv_dilation=2, out_nbh=16)

    key = jax.random.PRNGKey(0)
    k_param, k_x = jax.random.split(key)
    params = init_cnn1d_params(
        k_param, input_ch=cfg["input_ch"], in_deep=cfg["in_deep"],
        in_krnl_sz=cfg["in_krnl_sz"], in_nb_ch=cfg["in_nb_ch"],
        md_deep=cfg["md_deep"], md_krnl_sz=cfg["md_krnl_sz"],
        md_nb_ch=cfg["md_nb_ch"], out_conv_len=cfg["out_conv_len"],
        out_nbh=cfg["out_nbh"])

    x = jax.random.normal(k_x, (B, cfg["input_ch"], T), jnp.float32)

    fwd = jax.jit(functools.partial(
        cnn1d_forward, in_deep=cfg["in_deep"], md_deep=cfg["md_deep"],
        out_conv_dilation=cfg["out_conv_dilation"]))
    out = fwd(x, params)
    jax.block_until_ready(out)

    assert out.shape == (B, T, 3), out.shape
    assert bool(jnp.all(jnp.isfinite(out)))

    ref = cnn1d_reference(x, params, in_deep=cfg["in_deep"],
                          md_deep=cfg["md_deep"],
                          out_conv_dilation=cfg["out_conv_dilation"])
    max_err = float(jnp.max(jnp.abs(out - ref)))
    assert max_err < 5e-2, f"fused kernel mismatch: max abs err = {max_err}"
    print("KERNEL_OK")
</pallas_src>

<mosaic_0001>
module attributes {stable_mosaic.version = 11 : i64} {
  func.func @fused_cnn1d_kernel(%arg0: i32, %arg1: i32, %arg2: memref<1x44x4xf32, #tpu.memory_space<vmem>>, %arg3: memref<5x4x32xf32, #tpu.memory_space<vmem>>, %arg4: memref<1x32xf32, #tpu.memory_space<vmem>>, %arg5: memref<1x32xf32, #tpu.memory_space<vmem>>, %arg6: memref<5x32x32xf32, #tpu.memory_space<vmem>>, %arg7: memref<1x32xf32, #tpu.memory_space<vmem>>, %arg8: memref<1x32xf32, #tpu.memory_space<vmem>>, %arg9: memref<5x32x32xf32, #tpu.memory_space<vmem>>, %arg10: memref<1x32xf32, #tpu.memory_space<vmem>>, %arg11: memref<1x32xf32, #tpu.memory_space<vmem>>, %arg12: memref<5x32x16xf32, #tpu.memory_space<vmem>>, %arg13: memref<1x16xf32, #tpu.memory_space<vmem>>, %arg14: memref<1x16xf32, #tpu.memory_space<vmem>>, %arg15: memref<5x16x3xf32, #tpu.memory_space<vmem>>, %arg16: memref<1x3xf32, #tpu.memory_space<vmem>>, %arg17: memref<1x3xf32, #tpu.memory_space<vmem>>, %arg18: memref<1x16x3xf32, #tpu.memory_space<vmem>>) attributes {dimension_semantics = [#tpu.dimension_semantics<parallel>, #tpu.dimension_semantics<parallel>], iteration_bounds = array<i64: 2, 1>, scalar_prefetch = 0 : i64, scratch_operands = 0 : i64, tpu.core_type = #tpu.core_type<tc>, window_params = [{transform_indices = @transform_0, window_bounds = array<i64: 1, 44, 4>}, {pipeline_mode = #tpu.pipeline_mode<synchronous>, transform_indices = @transform_1, window_bounds = array<i64: 5, 4, 32>}, {pipeline_mode = #tpu.pipeline_mode<synchronous>, transform_indices = @transform_2, window_bounds = array<i64: 1, 32>}, {pipeline_mode = #tpu.pipeline_mode<synchronous>, transform_indices = @transform_3, window_bounds = array<i64: 1, 32>}, {pipeline_mode = #tpu.pipeline_mode<synchronous>, transform_indices = @transform_4, window_bounds = array<i64: 5, 32, 32>}, {pipeline_mode = #tpu.pipeline_mode<synchronous>, transform_indices = @transform_5, window_bounds = array<i64: 1, 32>}, {pipeline_mode = #tpu.pipeline_mode<synchronous>, transform_indices = @transform_6, window_bounds = array<i64: 1, 32>}, {pipeline_mode = #tpu.pipeline_mode<synchronous>, transform_indices = @transform_7, window_bounds = array<i64: 5, 32, 32>}, {pipeline_mode = #tpu.pipeline_mode<synchronous>, transform_indices = @transform_8, window_bounds = array<i64: 1, 32>}, {pipeline_mode = #tpu.pipeline_mode<synchronous>, transform_indices = @transform_9, window_bounds = array<i64: 1, 32>}, {pipeline_mode = #tpu.pipeline_mode<synchronous>, transform_indices = @transform_10, window_bounds = array<i64: 5, 32, 16>}, {pipeline_mode = #tpu.pipeline_mode<synchronous>, transform_indices = @transform_11, window_bounds = array<i64: 1, 16>}, {pipeline_mode = #tpu.pipeline_mode<synchronous>, transform_indices = @transform_12, window_bounds = array<i64: 1, 16>}, {pipeline_mode = #tpu.pipeline_mode<synchronous>, transform_indices = @transform_13, window_bounds = array<i64: 5, 16, 3>}, {pipeline_mode = #tpu.pipeline_mode<synchronous>, transform_indices = @transform_14, window_bounds = array<i64: 1, 3>}, {pipeline_mode = #tpu.pipeline_mode<synchronous>, transform_indices = @transform_15, window_bounds = array<i64: 1, 3>}, {transform_indices = @transform_16, window_bounds = array<i64: 1, 16, 3>}]} {
    %c16_i32 = arith.constant 16 : i32
    %0 = arith.muli %arg1, %c16_i32 : i32
    %1 = tpu.assume_multiple %0, 8 : i32
    %c0 = arith.constant 0 : index
    %2 = arith.index_cast %1 : i32 to index
    %c0_0 = arith.constant 0 : index
    %3 = vector.load %arg2[%c0, %2, %c0_0] : memref<1x44x4xf32, #tpu.memory_space<vmem>>, vector<1x44x4xf32>
    %4 = vector.shape_cast %3 : vector<1x44x4xf32> to vector<44x4xf32>
    %cst = arith.constant 0.000000e+00 : f32
    %5 = vector.broadcast %cst : f32 to vector<40x32xf32>
    %6 = vector.extract_strided_slice %4 {offsets = [0, 0], sizes = [40, 4], strides = [1, 1]} : vector<44x4xf32> to vector<40x4xf32>
    %c0_1 = arith.constant 0 : index
    %c0_2 = arith.constant 0 : index
    %c0_3 = arith.constant 0 : index
    %7 = vector.load %arg3[%c0_1, %c0_2, %c0_3] : memref<5x4x32xf32, #tpu.memory_space<vmem>>, vector<1x4x32xf32>
    %8 = vector.shape_cast %7 : vector<1x4x32xf32> to vector<4x32xf32>
    %cst_4 = arith.constant dense<0.000000e+00> : vector<40x32xf32>
    %9 = tpu.matmul %6, %8, %cst_4 {dimension_numbers = #tpu.dot_dimension_numbers<[1], [0], [0], [1], [0, 0, 1, 1], [], []>} : vector<40x4xf32>, vector<4x32xf32>, vector<40x32xf32> -> vector<40x32xf32>
    %10 = arith.addf %5, %9 : vector<40x32xf32>
    %11 = vector.extract_strided_slice %4 {offsets = [1, 0], sizes = [40, 4], strides = [1, 1]} : vector<44x4xf32> to vector<40x4xf32>
    %c1 = arith.constant 1 : index
    %c0_5 = arith.constant 0 : index
    %c0_6 = arith.constant 0 : index
    %12 = vector.load %arg3[%c1, %c0_5, %c0_6] : memref<5x4x32xf32, #tpu.memory_space<vmem>>, vector<1x4x32xf32>
    %13 = vector.shape_cast %12 : vector<1x4x32xf32> to vector<4x32xf32>
    %cst_7 = arith.constant dense<0.000000e+00> : vector<40x32xf32>
    %14 = tpu.matmul %11, %13, %cst_7 {dimension_numbers = #tpu.dot_dimension_numbers<[1], [0], [0], [1], [0, 0, 1, 1], [], []>} : vector<40x4xf32>, vector<4x32xf32>, vector<40x32xf32> -> vector<40x32xf32>
    %15 = arith.addf %10, %14 : vector<40x32xf32>
    %16 = vector.extract_strided_slice %4 {offsets = [2, 0], sizes = [40, 4], strides = [1, 1]} : vector<44x4xf32> to vector<40x4xf32>
    %c2 = arith.constant 2 : index
    %c0_8 = arith.constant 0 : index
    %c0_9 = arith.constant 0 : index
    %17 = vector.load %arg3[%c2, %c0_8, %c0_9] : memref<5x4x32xf32, #tpu.memory_space<vmem>>, vector<1x4x32xf32>
    %18 = vector.shape_cast %17 : vector<1x4x32xf32> to vector<4x32xf32>
    %cst_10 = arith.constant dense<0.000000e+00> : vector<40x32xf32>
    %19 = tpu.matmul %16, %18, %cst_10 {dimension_numbers = #tpu.dot_dimension_numbers<[1], [0], [0], [1], [0, 0, 1, 1], [], []>} : vector<40x4xf32>, vector<4x32xf32>, vector<40x32xf32> -> vector<40x32xf32>
    %20 = arith.addf %15, %19 : vector<40x32xf32>
    %21 = vector.extract_strided_slice %4 {offsets = [3, 0], sizes = [40, 4], strides = [1, 1]} : vector<44x4xf32> to vector<40x4xf32>
    %c3 = arith.constant 3 : index
    %c0_11 = arith.constant 0 : index
    %c0_12 = arith.constant 0 : index
    %22 = vector.load %arg3[%c3, %c0_11, %c0_12] : memref<5x4x32xf32, #tpu.memory_space<vmem>>, vector<1x4x32xf32>
    %23 = vector.shape_cast %22 : vector<1x4x32xf32> to vector<4x32xf32>
    %cst_13 = arith.constant dense<0.000000e+00> : vector<40x32xf32>
    %24 = tpu.matmul %21, %23, %cst_13 {dimension_numbers = #tpu.dot_dimension_numbers<[1], [0], [0], [1], [0, 0, 1, 1], [], []>} : vector<40x4xf32>, vector<4x32xf32>, vector<40x32xf32> -> vector<40x32xf32>
    %25 = arith.addf %20, %24 : vector<40x32xf32>
    %26 = vector.extract_strided_slice %4 {offsets = [4, 0], sizes = [40, 4], strides = [1, 1]} : vector<44x4xf32> to vector<40x4xf32>
    %c4 = arith.constant 4 : index
    %c0_14 = arith.constant 0 : index
    %c0_15 = arith.constant 0 : index
    %27 = vector.load %arg3[%c4, %c0_14, %c0_15] : memref<5x4x32xf32, #tpu.memory_space<vmem>>, vector<1x4x32xf32>
    %28 = vector.shape_cast %27 : vector<1x4x32xf32> to vector<4x32xf32>
    %cst_16 = arith.constant dense<0.000000e+00> : vector<40x32xf32>
    %29 = tpu.matmul %26, %28, %cst_16 {dimension_numbers = #tpu.dot_dimension_numbers<[1], [0], [0], [1], [0, 0, 1, 1], [], []>} : vector<40x4xf32>, vector<4x32xf32>, vector<40x32xf32> -> vector<40x32xf32>
    %30 = arith.addf %25, %29 : vector<40x32xf32>
    %c0_17 = arith.constant 0 : index
    %c0_18 = arith.constant 0 : index
    %31 = vector.load %arg4[%c0_17, %c0_18] : memref<1x32xf32, #tpu.memory_space<vmem>>, vector<1x32xf32>
    %32 = vector.broadcast %31 : vector<1x32xf32> to vector<40x32xf32>
    %33 = arith.addf %30, %32 : vector<40x32xf32>
    %cst_19 = arith.constant 0.000000e+00 : f32
    %34 = vector.broadcast %cst_19 : f32 to vector<40x32xf32>
    %35 = arith.cmpf oge, %33, %34 : vector<40x32xf32>
    %c0_20 = arith.constant 0 : index
    %c0_21 = arith.constant 0 : index
    %36 = vector.load %arg5[%c0_20, %c0_21] : memref<1x32xf32, #tpu.memory_space<vmem>>, vector<1x32xf32>
    %37 = vector.broadcast %36 : vector<1x32xf32> to vector<40x32xf32>
    %38 = arith.mulf %37, %33 : vector<40x32xf32>
    %39 = arith.select %35, %33, %38 : vector<40x32xi1>, vector<40x32xf32>
    %40 = tpu.iota {dimensions = array<i32: 0>} : vector<40x1xi32>
    %c24_i32 = arith.constant 24 : i32
    %41 = arith.subi %c24_i32, %1 : i32
    %42 = vector.broadcast %41 : i32 to vector<40x1xi32>
    %43 = arith.cmpi slt, %40, %42 : vector<40x1xi32>
    %cst_22 = arith.constant 0.000000e+00 : f32
    %44 = vector.shape_cast %43 : vector<40x1xi1> to vector<40x1xi1>
    %45 = vector.broadcast %44 : vector<40x1xi1> to vector<40x32xi1>
    %46 = vector.broadcast %cst_22 : f32 to vector<40x32xf32>
    %47 = arith.select %45, %46, %39 : vector<40x32xi1>, vector<40x32xf32>
    %cst_23 = arith.constant 0.000000e+00 : f32
    %48 = vector.broadcast %cst_23 : f32 to vector<36x32xf32>
    %49 = vector.extract_strided_slice %47 {offsets = [0, 0], sizes = [36, 32], strides = [1, 1]} : vector<40x32xf32> to vector<36x32xf32>
    %c0_24 = arith.constant 0 : index
    %c0_25 = arith.constant 0 : index
    %c0_26 = arith.constant 0 : index
    %50 = vector.load %arg6[%c0_24, %c0_25, %c0_26] : memref<5x32x32xf32, #tpu.memory_space<vmem>>, vector<1x32x32xf32>
    %51 = vector.shape_cast %50 : vector<1x32x32xf32> to vector<32x32xf32>
    %cst_27 = arith.constant dense<0.000000e+00> : vector<36x32xf32>
    %52 = tpu.matmul %49, %51, %cst_27 {dimension_numbers = #tpu.dot_dimension_numbers<[1], [0], [0], [1], [0, 0, 1, 1], [], []>} : vector<36x32xf32>, vector<32x32xf32>, vector<36x32xf32> -> vector<36x32xf32>
    %53 = arith.addf %48, %52 : vector<36x32xf32>
    %54 = vector.extract_strided_slice %47 {offsets = [1, 0], sizes = [36, 32], strides = [1, 1]} : vector<40x32xf32> to vector<36x32xf32>
    %c1_28 = arith.constant 1 : index
    %c0_29 = arith.constant 0 : index
    %c0_30 = arith.constant 0 : index
    %55 = vector.load %arg6[%c1_28, %c0_29, %c0_30] : memref<5x32x32xf32, #tpu.memory_space<vmem>>, vector<1x32x32xf32>
    %56 = vector.shape_cast %55 : vector<1x32x32xf32> to vector<32x32xf32>
    %cst_31 = arith.constant dense<0.000000e+00> : vector<36x32xf32>
    %57 = tpu.matmul %54, %56, %cst_31 {dimension_numbers = #tpu.dot_dimension_numbers<[1], [0], [0], [1], [0, 0, 1, 1], [], []>} : vector<36x32xf32>, vector<32x32xf32>, vector<36x32xf32> -> vector<36x32xf32>
    %58 = arith.addf %53, %57 : vector<36x32xf32>
    %59 = vector.extract_strided_slice %47 {offsets = [2, 0], sizes = [36, 32], strides = [1, 1]} : vector<40x32xf32> to vector<36x32xf32>
    %c2_32 = arith.constant 2 : index
    %c0_33 = arith.constant 0 : index
    %c0_34 = arith.constant 0 : index
    %60 = vector.load %arg6[%c2_32, %c0_33, %c0_34] : memref<5x32x32xf32, #tpu.memory_space<vmem>>, vector<1x32x32xf32>
    %61 = vector.shape_cast %60 : vector<1x32x32xf32> to vector<32x32xf32>
    %cst_35 = arith.constant dense<0.000000e+00> : vector<36x32xf32>
    %62 = tpu.matmul %59, %61, %cst_35 {dimension_numbers = #tpu.dot_dimension_numbers<[1], [0], [0], [1], [0, 0, 1, 1], [], []>} : vector<36x32xf32>, vector<32x32xf32>, vector<36x32xf32> -> vector<36x32xf32>
    %63 = arith.addf %58, %62 : vector<36x32xf32>
    %64 = vector.extract_strided_slice %47 {offsets = [3, 0], sizes = [36, 32], strides = [1, 1]} : vector<40x32xf32> to vector<36x32xf32>
    %c3_36 = arith.constant 3 : index
    %c0_37 = arith.constant 0 : index
    %c0_38 = arith.constant 0 : index
    %65 = vector.load %arg6[%c3_36, %c0_37, %c0_38] : memref<5x32x32xf32, #tpu.memory_space<vmem>>, vector<1x32x32xf32>
    %66 = vector.shape_cast %65 : vector<1x32x32xf32> to vector<32x32xf32>
    %cst_39 = arith.constant dense<0.000000e+00> : vector<36x32xf32>
    %67 = tpu.matmul %64, %66, %cst_39 {dimension_numbers = #tpu.dot_dimension_numbers<[1], [0], [0], [1], [0, 0, 1, 1], [], []>} : vector<36x32xf32>, vector<32x32xf32>, vector<36x32xf32> -> vector<36x32xf32>
    %68 = arith.addf %63, %67 : vector<36x32xf32>
    %69 = vector.extract_strided_slice %47 {offsets = [4, 0], sizes = [36, 32], strides = [1, 1]} : vector<40x32xf32> to vector<36x32xf32>
    %c4_40 = arith.constant 4 : index
    %c0_41 = arith.constant 0 : index
    %c0_42 = arith.constant 0 : index
    %70 = vector.load %arg6[%c4_40, %c0_41, %c0_42] : memref<5x32x32xf32, #tpu.memory_space<vmem>>, vector<1x32x32xf32>
    %71 = vector.shape_cast %70 : vector<1x32x32xf32> to vector<32x32xf32>
    %cst_43 = arith.constant dense<0.000000e+00> : vector<36x32xf32>
    %72 = tpu.matmul %69, %71, %cst_43 {dimension_numbers = #tpu.dot_dimension_numbers<[1], [0], [0], [1], [0, 0, 1, 1], [], []>} : vector<36x32xf32>, vector<32x32xf32>, vector<36x32xf32> -> vector<36x32xf32>
    %73 = arith.addf %68, %72 : vector<36x32xf32>
    %c0_44 = arith.constant 0 : index
    %c0_45 = arith.constant 0 : index
    %74 = vector.load %arg7[%c0_44, %c0_45] : memref<1x32xf32, #tpu.memory_space<vmem>>, vector<1x32xf32>
    %75 = vector.broadcast %74 : vector<1x32xf32> to vector<36x32xf32>
    %76 = arith.addf %73, %75 : vector<36x32xf32>
    %cst_46 = arith.constant 0.000000e+00 : f32
    %77 = vector.broadcast %cst_46 : f32 to vector<36x32xf32>
    %78 = arith.cmpf oge, %76, %77 : vector<36x32xf32>
    %c0_47 = arith.constant 0 : index
    %c0_48 = arith.constant 0 : index
    %79 = vector.load %arg8[%c0_47, %c0_48] : memref<1x32xf32, #tpu.memory_space<vmem>>, vector<1x32xf32>
    %80 = vector.broadcast %79 : vector<1x32xf32> to vector<36x32xf32>
    %81 = arith.mulf %80, %76 : vector<36x32xf32>
    %82 = arith.select %78, %76, %81 : vector<36x32xi1>, vector<36x32xf32>
    %83 = tpu.iota {dimensions = array<i32: 0>} : vector<36x1xi32>
    %c20_i32 = arith.constant 20 : i32
    %84 = arith.subi %c20_i32, %1 : i32
    %85 = vector.broadcast %84 : i32 to vector<36x1xi32>
    %86 = arith.cmpi slt, %83, %85 : vector<36x1xi32>
    %cst_49 = arith.constant 0.000000e+00 : f32
    %87 = vector.shape_cast %86 : vector<36x1xi1> to vector<36x1xi1>
    %88 = vector.broadcast %87 : vector<36x1xi1> to vector<36x32xi1>
    %89 = vector.broadcast %cst_49 : f32 to vector<36x32xf32>
    %90 = arith.select %88, %89, %82 : vector<36x32xi1>, vector<36x32xf32>
    %cst_50 = arith.constant 0.000000e+00 : f32
    %91 = vector.broadcast %cst_50 : f32 to vector<32x32xf32>
    %92 = vector.extract_strided_slice %90 {offsets = [0, 0], sizes = [32, 32], strides = [1, 1]} : vector<36x32xf32> to vector<32x32xf32>
    %c0_51 = arith.constant 0 : index
    %c0_52 = arith.constant 0 : index
    %c0_53 = arith.constant 0 : index
    %93 = vector.load %arg9[%c0_51, %c0_52, %c0_53] : memref<5x32x32xf32, #tpu.memory_space<vmem>>, vector<1x32x32xf32>
    %94 = vector.shape_cast %93 : vector<1x32x32xf32> to vector<32x32xf32>
    %cst_54 = arith.constant dense<0.000000e+00> : vector<32x32xf32>
    %95 = tpu.matmul %92, %94, %cst_54 {dimension_numbers = #tpu.dot_dimension_numbers<[1], [0], [0], [1], [0, 0, 1, 1], [], []>} : vector<32x32xf32>, vector<32x32xf32>, vector<32x32xf32> -> vector<32x32xf32>
    %96 = arith.addf %91, %95 : vector<32x32xf32>
    %97 = vector.extract_strided_slice %90 {offsets = [1, 0], sizes = [32, 32], strides = [1, 1]} : vector<36x32xf32> to vector<32x32xf32>
    %c1_55 = arith.constant 1 : index
    %c0_56 = arith.constant 0 : index
    %c0_57 = arith.constant 0 : index
    %98 = vector.load %arg9[%c1_55, %c0_56, %c0_57] : memref<5x32x32xf32, #tpu.memory_space<vmem>>, vector<1x32x32xf32>
    %99 = vector.shape_cast %98 : vector<1x32x32xf32> to vector<32x32xf32>
    %cst_58 = arith.constant dense<0.000000e+00> : vector<32x32xf32>
    %100 = tpu.matmul %97, %99, %cst_58 {dimension_numbers = #tpu.dot_dimension_numbers<[1], [0], [0], [1], [0, 0, 1, 1], [], []>} : vector<32x32xf32>, vector<32x32xf32>, vector<32x32xf32> -> vector<32x32xf32>
    %101 = arith.addf %96, %100 : vector<32x32xf32>
    %102 = vector.extract_strided_slice %90 {offsets = [2, 0], sizes = [32, 32], strides = [1, 1]} : vector<36x32xf32> to vector<32x32xf32>
    %c2_59 = arith.constant 2 : index
    %c0_60 = arith.constant 0 : index
    %c0_61 = arith.constant 0 : index
    %103 = vector.load %arg9[%c2_59, %c0_60, %c0_61] : memref<5x32x32xf32, #tpu.memory_space<vmem>>, vector<1x32x32xf32>
    %104 = vector.shape_cast %103 : vector<1x32x32xf32> to vector<32x32xf32>
    %cst_62 = arith.constant dense<0.000000e+00> : vector<32x32xf32>
    %105 = tpu.matmul %102, %104, %cst_62 {dimension_numbers = #tpu.dot_dimension_numbers<[1], [0], [0], [1], [0, 0, 1, 1], [], []>} : vector<32x32xf32>, vector<32x32xf32>, vector<32x32xf32> -> vector<32x32xf32>
    %106 = arith.addf %101, %105 : vector<32x32xf32>
    %107 = vector.extract_strided_slice %90 {offsets = [3, 0], sizes = [32, 32], strides = [1, 1]} : vector<36x32xf32> to vector<32x32xf32>
    %c3_63 = arith.constant 3 : index
    %c0_64 = arith.constant 0 : index
    %c0_65 = arith.constant 0 : index
    %108 = vector.load %arg9[%c3_63, %c0_64, %c0_65] : memref<5x32x32xf32, #tpu.memory_space<vmem>>, vector<1x32x32xf32>
    %109 = vector.shape_cast %108 : vector<1x32x32xf32> to vector<32x32xf32>
    %cst_66 = arith.constant dense<0.000000e+00> : vector<32x32xf32>
    %110 = tpu.matmul %107, %109, %cst_66 {dimension_numbers = #tpu.dot_dimension_numbers<[1], [0], [0], [1], [0, 0, 1, 1], [], []>} : vector<32x32xf32>, vector<32x32xf32>, vector<32x32xf32> -> vector<32x32xf32>
    %111 = arith.addf %106, %110 : vector<32x32xf32>
    %112 = vector.extract_strided_slice %90 {offsets = [4, 0], sizes = [32, 32], strides = [1, 1]} : vector<36x32xf32> to vector<32x32xf32>
    %c4_67 = arith.constant 4 : index
    %c0_68 = arith.constant 0 : index
    %c0_69 = arith.constant 0 : index
    %113 = vector.load %arg9[%c4_67, %c0_68, %c0_69] : memref<5x32x32xf32, #tpu.memory_space<vmem>>, vector<1x32x32xf32>
    %114 = vector.shape_cast %113 : vector<1x32x32xf32> to vector<32x32xf32>
    %cst_70 = arith.constant dense<0.000000e+00> : vector<32x32xf32>
    %115 = tpu.matmul %112, %114, %cst_70 {dimension_numbers = #tpu.dot_dimension_numbers<[1], [0], [0], [1], [0, 0, 1, 1], [], []>} : vector<32x32xf32>, vector<32x32xf32>, vector<32x32xf32> -> vector<32x32xf32>
    %116 = arith.addf %111, %115 : vector<32x32xf32>
    %c0_71 = arith.constant 0 : index
    %c0_72 = arith.constant 0 : index
    %117 = vector.load %arg10[%c0_71, %c0_72] : memref<1x32xf32, #tpu.memory_space<vmem>>, vector<1x32xf32>
    %118 = vector.broadcast %117 : vector<1x32xf32> to vector<32x32xf32>
    %119 = arith.addf %116, %118 : vector<32x32xf32>
    %cst_73 = arith.constant 0.000000e+00 : f32
    %120 = vector.broadcast %cst_73 : f32 to vector<32x32xf32>
    %121 = arith.cmpf oge, %119, %120 : vector<32x32xf32>
    %c0_74 = arith.constant 0 : index
    %c0_75 = arith.constant 0 : index
    %122 = vector.load %arg11[%c0_74, %c0_75] : memref<1x32xf32, #tpu.memory_space<vmem>>, vector<1x32xf32>
    %123 = vector.broadcast %122 : vector<1x32xf32> to vector<32x32xf32>
    %124 = arith.mulf %123, %119 : vector<32x32xf32>
    %125 = arith.select %121, %119, %124 : vector<32x32xi1>, vector<32x32xf32>
    %126 = tpu.iota {dimensions = array<i32: 0>} : vector<32x1xi32>
    %c16_i32_76 = arith.constant 16 : i32
    %127 = arith.subi %c16_i32_76, %1 : i32
    %128 = vector.broadcast %127 : i32 to vector<32x1xi32>
    %129 = arith.cmpi slt, %126, %128 : vector<32x1xi32>
    %cst_77 = arith.constant 0.000000e+00 : f32
    %130 = vector.shape_cast %129 : vector<32x1xi1> to vector<32x1xi1>
    %131 = vector.broadcast %130 : vector<32x1xi1> to vector<32x32xi1>
    %132 = vector.broadcast %cst_77 : f32 to vector<32x32xf32>
    %133 = arith.select %131, %132, %125 : vector<32x32xi1>, vector<32x32xf32>
    %cst_78 = arith.constant 0.000000e+00 : f32
    %134 = vector.broadcast %cst_78 : f32 to vector<24x16xf32>
    %135 = vector.extract_strided_slice %133 {offsets = [0, 0], sizes = [24, 32], strides = [1, 1]} : vector<32x32xf32> to vector<24x32xf32>
    %c0_79 = arith.constant 0 : index
    %c0_80 = arith.constant 0 : index
    %c0_81 = arith.constant 0 : index
    %136 = vector.load %arg12[%c0_79, %c0_80, %c0_81] : memref<5x32x16xf32, #tpu.memory_space<vmem>>, vector<1x32x16xf32>
    %137 = vector.shape_cast %136 : vector<1x32x16xf32> to vector<32x16xf32>
    %cst_82 = arith.constant dense<0.000000e+00> : vector<24x16xf32>
    %138 = tpu.matmul %135, %137, %cst_82 {dimension_numbers = #tpu.dot_dimension_numbers<[1], [0], [0], [1], [0, 0, 1, 1], [], []>} : vector<24x32xf32>, vector<32x16xf32>, vector<24x16xf32> -> vector<24x16xf32>
    %139 = arith.addf %134, %138 : vector<24x16xf32>
    %140 = vector.extract_strided_slice %133 {offsets = [2, 0], sizes = [24, 32], strides = [1, 1]} : vector<32x32xf32> to vector<24x32xf32>
    %c1_83 = arith.constant 1 : index
    %c0_84 = arith.constant 0 : index
    %c0_85 = arith.constant 0 : index
    %141 = vector.load %arg12[%c1_83, %c0_84, %c0_85] : memref<5x32x16xf32, #tpu.memory_space<vmem>>, vector<1x32x16xf32>
    %142 = vector.shape_cast %141 : vector<1x32x16xf32> to vector<32x16xf32>
    %cst_86 = arith.constant dense<0.000000e+00> : vector<24x16xf32>
    %143 = tpu.matmul %140, %142, %cst_86 {dimension_numbers = #tpu.dot_dimension_numbers<[1], [0], [0], [1], [0, 0, 1, 1], [], []>} : vector<24x32xf32>, vector<32x16xf32>, vector<24x16xf32> -> vector<24x16xf32>
    %144 = arith.addf %139, %143 : vector<24x16xf32>
    %145 = vector.extract_strided_slice %133 {offsets = [4, 0], sizes = [24, 32], strides = [1, 1]} : vector<32x32xf32> to vector<24x32xf32>
    %c2_87 = arith.constant 2 : index
    %c0_88 = arith.constant 0 : index
    %c0_89 = arith.constant 0 : index
    %146 = vector.load %arg12[%c2_87, %c0_88, %c0_89] : memref<5x32x16xf32, #tpu.memory_space<vmem>>, vector<1x32x16xf32>
    %147 = vector.shape_cast %146 : vector<1x32x16xf32> to vector<32x16xf32>
    %cst_90 = arith.constant dense<0.000000e+00> : vector<24x16xf32>
    %148 = tpu.matmul %145, %147, %cst_90 {dimension_numbers = #tpu.dot_dimension_numbers<[1], [0], [0], [1], [0, 0, 1, 1], [], []>} : vector<24x32xf32>, vector<32x16xf32>, vector<24x16xf32> -> vector<24x16xf32>
    %149 = arith.addf %144, %148 : vector<24x16xf32>
    %150 = vector.extract_strided_slice %133 {offsets = [6, 0], sizes = [24, 32], strides = [1, 1]} : vector<32x32xf32> to vector<24x32xf32>
    %c3_91 = arith.constant 3 : index
    %c0_92 = arith.constant 0 : index
    %c0_93 = arith.constant 0 : index
    %151 = vector.load %arg12[%c3_91, %c0_92, %c0_93] : memref<5x32x16xf32, #tpu.memory_space<vmem>>, vector<1x32x16xf32>
    %152 = vector.shape_cast %151 : vector<1x32x16xf32> to vector<32x16xf32>
    %cst_94 = arith.constant dense<0.000000e+00> : vector<24x16xf32>
    %153 = tpu.matmul %150, %152, %cst_94 {dimension_numbers = #tpu.dot_dimension_numbers<[1], [0], [0], [1], [0, 0, 1, 1], [], []>} : vector<24x32xf32>, vector<32x16xf32>, vector<24x16xf32> -> vector<24x16xf32>
    %154 = arith.addf %149, %153 : vector<24x16xf32>
    %155 = vector.extract_strided_slice %133 {offsets = [8, 0], sizes = [24, 32], strides = [1, 1]} : vector<32x32xf32> to vector<24x32xf32>
    %c4_95 = arith.constant 4 : index
    %c0_96 = arith.constant 0 : index
    %c0_97 = arith.constant 0 : index
    %156 = vector.load %arg12[%c4_95, %c0_96, %c0_97] : memref<5x32x16xf32, #tpu.memory_space<vmem>>, vector<1x32x16xf32>
    %157 = vector.shape_cast %156 : vector<1x32x16xf32> to vector<32x16xf32>
    %cst_98 = arith.constant dense<0.000000e+00> : vector<24x16xf32>
    %158 = tpu.matmul %155, %157, %cst_98 {dimension_numbers = #tpu.dot_dimension_numbers<[1], [0], [0], [1], [0, 0, 1, 1], [], []>} : vector<24x32xf32>, vector<32x16xf32>, vector<24x16xf32> -> vector<24x16xf32>
    %159 = arith.addf %154, %158 : vector<24x16xf32>
    %c0_99 = arith.constant 0 : index
    %c0_100 = arith.constant 0 : index
    %160 = vector.load %arg13[%c0_99, %c0_100] : memref<1x16xf32, #tpu.memory_space<vmem>>, vector<1x16xf32>
    %161 = vector.broadcast %160 : vector<1x16xf32> to vector<24x16xf32>
    %162 = arith.addf %159, %161 : vector<24x16xf32>
    %cst_101 = arith.constant 0.000000e+00 : f32
    %163 = vector.broadcast %cst_101 : f32 to vector<24x16xf32>
    %164 = arith.cmpf oge, %162, %163 : vector<24x16xf32>
    %c0_102 = arith.constant 0 : index
    %c0_103 = arith.constant 0 : index
    %165 = vector.load %arg14[%c0_102, %c0_103] : memref<1x16xf32, #tpu.memory_space<vmem>>, vector<1x16xf32>
    %166 = vector.broadcast %165 : vector<1x16xf32> to vector<24x16xf32>
    %167 = arith.mulf %166, %162 : vector<24x16xf32>
    %168 = arith.select %164, %162, %167 : vector<24x16xi1>, vector<24x16xf32>
    %169 = tpu.iota {dimensions = array<i32: 0>} : vector<24x1xi32>
    %c8_i32 = arith.constant 8 : i32
    %170 = arith.subi %c8_i32, %1 : i32
    %171 = vector.broadcast %170 : i32 to vector<24x1xi32>
    %172 = arith.cmpi slt, %169, %171 : vector<24x1xi32>
    %cst_104 = arith.constant 0.000000e+00 : f32
    %173 = vector.shape_cast %172 : vector<24x1xi1> to vector<24x1xi1>
    %174 = vector.broadcast %173 : vector<24x1xi1> to vector<24x16xi1>
    %175 = vector.broadcast %cst_104 : f32 to vector<24x16xf32>
    %176 = arith.select %174, %175, %168 : vector<24x16xi1>, vector<24x16xf32>
    %cst_105 = arith.constant 0.000000e+00 : f32
    %177 = vector.broadcast %cst_105 : f32 to vector<16x3xf32>
    %178 = vector.extract_strided_slice %176 {offsets = [0, 0], sizes = [16, 16], strides = [1, 1]} : vector<24x16xf32> to vector<16x16xf32>
    %c0_106 = arith.constant 0 : index
    %c0_107 = arith.constant 0 : index
    %c0_108 = arith.constant 0 : index
    %179 = vector.load %arg15[%c0_106, %c0_107, %c0_108] : memref<5x16x3xf32, #tpu.memory_space<vmem>>, vector<1x16x3xf32>
    %180 = vector.shape_cast %179 : vector<1x16x3xf32> to vector<16x3xf32>
    %cst_109 = arith.constant dense<0.000000e+00> : vector<16x3xf32>
    %181 = tpu.matmul %178, %180, %cst_109 {dimension_numbers = #tpu.dot_dimension_numbers<[1], [0], [0], [1], [0, 0, 1, 1], [], []>} : vector<16x16xf32>, vector<16x3xf32>, vector<16x3xf32> -> vector<16x3xf32>
    %182 = arith.addf %177, %181 : vector<16x3xf32>
    %183 = vector.extract_strided_slice %176 {offsets = [2, 0], sizes = [16, 16], strides = [1, 1]} : vector<24x16xf32> to vector<16x16xf32>
    %c1_110 = arith.constant 1 : index
    %c0_111 = arith.constant 0 : index
    %c0_112 = arith.constant 0 : index
    %184 = vector.load %arg15[%c1_110, %c0_111, %c0_112] : memref<5x16x3xf32, #tpu.memory_space<vmem>>, vector<1x16x3xf32>
    %185 = vector.shape_cast %184 : vector<1x16x3xf32> to vector<16x3xf32>
    %cst_113 = arith.constant dense<0.000000e+00> : vector<16x3xf32>
    %186 = tpu.matmul %183, %185, %cst_113 {dimension_numbers = #tpu.dot_dimension_numbers<[1], [0], [0], [1], [0, 0, 1, 1], [], []>} : vector<16x16xf32>, vector<16x3xf32>, vector<16x3xf32> -> vector<16x3xf32>
    %187 = arith.addf %182, %186 : vector<16x3xf32>
    %188 = vector.extract_strided_slice %176 {offsets = [4, 0], sizes = [16, 16], strides = [1, 1]} : vector<24x16xf32> to vector<16x16xf32>
    %c2_114 = arith.constant 2 : index
    %c0_115 = arith.constant 0 : index
    %c0_116 = arith.constant 0 : index
    %189 = vector.load %arg15[%c2_114, %c0_115, %c0_116] : memref<5x16x3xf32, #tpu.memory_space<vmem>>, vector<1x16x3xf32>
    %190 = vector.shape_cast %189 : vector<1x16x3xf32> to vector<16x3xf32>
    %cst_117 = arith.constant dense<0.000000e+00> : vector<16x3xf32>
    %191 = tpu.matmul %188, %190, %cst_117 {dimension_numbers = #tpu.dot_dimension_numbers<[1], [0], [0], [1], [0, 0, 1, 1], [], []>} : vector<16x16xf32>, vector<16x3xf32>, vector<16x3xf32> -> vector<16x3xf32>
    %192 = arith.addf %187, %191 : vector<16x3xf32>
    %193 = vector.extract_strided_slice %176 {offsets = [6, 0], sizes = [16, 16], strides = [1, 1]} : vector<24x16xf32> to vector<16x16xf32>
    %c3_118 = arith.constant 3 : index
    %c0_119 = arith.constant 0 : index
    %c0_120 = arith.constant 0 : index
    %194 = vector.load %arg15[%c3_118, %c0_119, %c0_120] : memref<5x16x3xf32, #tpu.memory_space<vmem>>, vector<1x16x3xf32>
    %195 = vector.shape_cast %194 : vector<1x16x3xf32> to vector<16x3xf32>
    %cst_121 = arith.constant dense<0.000000e+00> : vector<16x3xf32>
    %196 = tpu.matmul %193, %195, %cst_121 {dimension_numbers = #tpu.dot_dimension_numbers<[1], [0], [0], [1], [0, 0, 1, 1], [], []>} : vector<16x16xf32>, vector<16x3xf32>, vector<16x3xf32> -> vector<16x3xf32>
    %197 = arith.addf %192, %196 : vector<16x3xf32>
    %198 = vector.extract_strided_slice %176 {offsets = [8, 0], sizes = [16, 16], strides = [1, 1]} : vector<24x16xf32> to vector<16x16xf32>
    %c4_122 = arith.constant 4 : index
    %c0_123 = arith.constant 0 : index
    %c0_124 = arith.constant 0 : index
    %199 = vector.load %arg15[%c4_122, %c0_123, %c0_124] : memref<5x16x3xf32, #tpu.memory_space<vmem>>, vector<1x16x3xf32>
    %200 = vector.shape_cast %199 : vector<1x16x3xf32> to vector<16x3xf32>
    %cst_125 = arith.constant dense<0.000000e+00> : vector<16x3xf32>
    %201 = tpu.matmul %198, %200, %cst_125 {dimension_numbers = #tpu.dot_dimension_numbers<[1], [0], [0], [1], [0, 0, 1, 1], [], []>} : vector<16x16xf32>, vector<16x3xf32>, vector<16x3xf32> -> vector<16x3xf32>
    %202 = arith.addf %197, %201 : vector<16x3xf32>
    %c0_126 = arith.constant 0 : index
    %c0_127 = arith.constant 0 : index
    %203 = vector.load %arg16[%c0_126, %c0_127] : memref<1x3xf32, #tpu.memory_space<vmem>>, vector<1x3xf32>
    %204 = vector.broadcast %203 : vector<1x3xf32> to vector<16x3xf32>
    %205 = arith.addf %202, %204 : vector<16x3xf32>
    %206 = math.tanh %205 : vector<16x3xf32>
    %c0_128 = arith.constant 0 : index
    %c0_129 = arith.constant 0 : index
    %c0_130 = arith.constant 0 : index
    %207 = vector.load %arg18[%c0_128, %c0_129, %c0_130] : memref<1x16x3xf32, #tpu.memory_space<vmem>>, vector<1x16x3xf32>
    %208 = vector.shape_cast %207 : vector<1x16x3xf32> to vector<16x3xf32>
    %209 = vector.shape_cast %206 : vector<16x3xf32> to vector<1x16x3xf32>
    tpu.vector_store %arg18[%c0_128, %c0_129, %c0_130], %209 {strides = array<i32>} : memref<1x16x3xf32, #tpu.memory_space<vmem>>, vector<1x16x3xf32>,
    return
  }
  func.func @transform_0(%arg0: i32, %arg1: i32) -> (i32, i32, i32) {
    %c0_i32 = arith.constant 0 : i32
    %c0_i32_0 = arith.constant 0 : i32
    %c0_i32_1 = arith.constant 0 : i32
    return %arg0, %c0_i32, %c0_i32_0 : i32, i32, i32
  }
  func.func @transform_1(%arg0: i32, %arg1: i32) -> (i32, i32, i32) {
    %c0_i32 = arith.constant 0 : i32
    %c0_i32_0 = arith.constant 0 : i32
    %c0_i32_1 = arith.constant 0 : i32
    %c0_i32_2 = arith.constant 0 : i32
    return %c0_i32, %c0_i32_0, %c0_i32_1 : i32, i32, i32
  }
  func.func @transform_2(%arg0: i32, %arg1: i32) -> (i32, i32) {
    %c0_i32 = arith.constant 0 : i32
    %c0_i32_0 = arith.constant 0 : i32
    %c0_i32_1 = arith.constant 0 : i32
    return %c0_i32, %c0_i32_0 : i32, i32
  }
  func.func @transform_3(%arg0: i32, %arg1: i32) -> (i32, i32) {
    %c0_i32 = arith.constant 0 : i32
    %c0_i32_0 = arith.constant 0 : i32
    %c0_i32_1 = arith.constant 0 : i32
    return %c0_i32, %c0_i32_0 : i32, i32
  }
  func.func @transform_4(%arg0: i32, %arg1: i32) -> (i32, i32, i32) {
    %c0_i32 = arith.constant 0 : i32
    %c0_i32_0 = arith.constant 0 : i32
    %c0_i32_1 = arith.constant 0 : i32
    %c0_i32_2 = arith.constant 0 : i32
    return %c0_i32, %c0_i32_0, %c0_i32_1 : i32, i32, i32
  }
  func.func @transform_5(%arg0: i32, %arg1: i32) -> (i32, i32) {
    %c0_i32 = arith.constant 0 : i32
    %c0_i32_0 = arith.constant 0 : i32
    %c0_i32_1 = arith.constant 0 : i32
    return %c0_i32, %c0_i32_0 : i32, i32
  }
  func.func @transform_6(%arg0: i32, %arg1: i32) -> (i32, i32) {
    %c0_i32 = arith.constant 0 : i32
    %c0_i32_0 = arith.constant 0 : i32
    %c0_i32_1 = arith.constant 0 : i32
    return %c0_i32, %c0_i32_0 : i32, i32
  }
  func.func @transform_7(%arg0: i32, %arg1: i32) -> (i32, i32, i32) {
    %c0_i32 = arith.constant 0 : i32
    %c0_i32_0 = arith.constant 0 : i32
    %c0_i32_1 = arith.constant 0 : i32
    %c0_i32_2 = arith.constant 0 : i32
    return %c0_i32, %c0_i32_0, %c0_i32_1 : i32, i32, i32
  }
  func.func @transform_8(%arg0: i32, %arg1: i32) -> (i32, i32) {
    %c0_i32 = arith.constant 0 : i32
    %c0_i32_0 = arith.constant 0 : i32
    %c0_i32_1 = arith.constant 0 : i32
    return %c0_i32, %c0_i32_0 : i32, i32
  }
  func.func @transform_9(%arg0: i32, %arg1: i32) -> (i32, i32) {
    %c0_i32 = arith.constant 0 : i32
    %c0_i32_0 = arith.constant 0 : i32
    %c0_i32_1 = arith.constant 0 : i32
    return %c0_i32, %c0_i32_0 : i32, i32
  }
  func.func @transform_10(%arg0: i32, %arg1: i32) -> (i32, i32, i32) {
    %c0_i32 = arith.constant 0 : i32
    %c0_i32_0 = arith.constant 0 : i32
    %c0_i32_1 = arith.constant 0 : i32
    %c0_i32_2 = arith.constant 0 : i32
    return %c0_i32, %c0_i32_0, %c0_i32_1 : i32, i32, i32
  }
  func.func @transform_11(%arg0: i32, %arg1: i32) -> (i32, i32) {
    %c0_i32 = arith.constant 0 : i32
    %c0_i32_0 = arith.constant 0 : i32
    %c0_i32_1 = arith.constant 0 : i32
    return %c0_i32, %c0_i32_0 : i32, i32
  }
  func.func @transform_12(%arg0: i32, %arg1: i32) -> (i32, i32) {
    %c0_i32 = arith.constant 0 : i32
    %c0_i32_0 = arith.constant 0 : i32
    %c0_i32_1 = arith.constant 0 : i32
    return %c0_i32, %c0_i32_0 : i32, i32
  }
  func.func @transform_13(%arg0: i32, %arg1: i32) -> (i32, i32, i32) {
    %c0_i32 = arith.constant 0 : i32
    %c0_i32_0 = arith.constant 0 : i32
    %c0_i32_1 = arith.constant 0 : i32
    %c0_i32_2 = arith.constant 0 : i32
    return %c0_i32, %c0_i32_0, %c0_i32_1 : i32, i32, i32
  }
  func.func @transform_14(%arg0: i32, %arg1: i32) -> (i32, i32) {
    %c0_i32 = arith.constant 0 : i32
    %c0_i32_0 = arith.constant 0 : i32
    %c0_i32_1 = arith.constant 0 : i32
    return %c0_i32, %c0_i32_0 : i32, i32
  }
  func.func @transform_15(%arg0: i32, %arg1: i32) -> (i32, i32) {
    %c0_i32 = arith.constant 0 : i32
    %c0_i32_0 = arith.constant 0 : i32
    %c0_i32_1 = arith.constant 0 : i32
    return %c0_i32, %c0_i32_0 : i32, i32
  }
  func.func @transform_16(%arg0: i32, %arg1: i32) -> (i32, i32, i32) {
    %c0_i32 = arith.constant 0 : i32
    %c0_i32_0 = arith.constant 0 : i32
    return %arg0, %arg1, %c0_i32 : i32, i32, i32
  }
}

</mosaic_0001>

<llo_original>
// kernel: cnn1d_forward.1
$region0: #{cnn1d_forward.1}
  #allocation0 [shape = 'u32[]', space=smem, size = 0x4, offset = 0x4, fixed_abs, tag = 'smem constant byte address 0x4 - core index']
  #allocation1 [shape = 'u32[72,128]{1,0:T(1,128)}', space=vmem, size = 0x9000, scoped, tag = 'internal scratch']
  %s0 = inlined_call_operand.vmem [shape: f32[2,44,4], index: 0, kind: input, shape index: {}]
  %s1 = inlined_call_operand.vmem [shape: f32[5,4,32], index: 1, kind: input, shape index: {}]
  %s2 = inlined_call_operand.vmem [shape: f32[1,32], index: 2, kind: input, shape index: {}]
  %s3 = inlined_call_operand.vmem [shape: f32[1,32], index: 3, kind: input, shape index: {}]
  %s4 = inlined_call_operand.vmem [shape: f32[5,32,32], index: 4, kind: input, shape index: {}]
  %s5 = inlined_call_operand.vmem [shape: f32[1,32], index: 5, kind: input, shape index: {}]
  %s6 = inlined_call_operand.vmem [shape: f32[1,32], index: 6, kind: input, shape index: {}]
  %s7 = inlined_call_operand.vmem [shape: f32[5,32,32], index: 7, kind: input, shape index: {}]
  %s8 = inlined_call_operand.vmem [shape: f32[1,32], index: 8, kind: input, shape index: {}]
  %s9 = inlined_call_operand.vmem [shape: f32[1,32], index: 9, kind: input, shape index: {}]
  %s10 = inlined_call_operand.vmem [shape: f32[5,32,16], index: 10, kind: input, shape index: {}]
  %s11 = inlined_call_operand.vmem [shape: f32[1,16], index: 11, kind: input, shape index: {}]
  %s12 = inlined_call_operand.vmem [shape: f32[1,16], index: 12, kind: input, shape index: {}]
  %s13 = inlined_call_operand.vmem [shape: f32[5,16,3], index: 13, kind: input, shape index: {}]
  %s14 = inlined_call_operand.vmem [shape: f32[1,3], index: 14, kind: input, shape index: {}]
  %s15 = inlined_call_operand.vmem [shape: f32[1,3], index: 15, kind: input, shape index: {}]
  %s16 = inlined_call_operand.vmem [shape: f32[2,16,3], index: 16, kind: output, shape index: {}]
  %s17 = sld [smem:[#allocation0]]
  $region97: #{cnn1d_forward.1} parent=0
    _
  %s19 = ssub.s32 1, %s17
  %s20 = scalar_select 0, %s19, %s17
  loop: start=0, step=1, limit=4
  $region2: #{cnn1d_forward.1} parent=0 // loop_pre_header
    _
  $region3: #{cnn1d_forward.1} parent=0 // loop_header
    %s22 = sphi 0, %s26
    %p23 = scmp.ge.s32.totalorder %s22, 4
    %s29 = sphi 0, %s41
    %s30 = sphi 0, %s37
    %s31 = sphi 0, %s29
    %s32 = sphi 0, %s30
    %s33 = sphi 0, %s31
    %s34 = sphi 0, %s32
    %s44 = sphi 0, %s46
    %s47 = sphi 0, %s44
    %s48 = sphi 0, %s47
    %s64 = sphi 0, %s48
    %s68 = sphi 0, %s68
    %s70 = sphi 0, %s68
    %s71 = sphi 0, %s70
    %s85 = sphi 0, %s71
    %s89 = sphi 0, %s89
    %s91 = sphi 0, %s89
    %s92 = sphi 0, %s91
    %s106 = sphi 0, %s92
    %s110 = sphi 0, %s110
    %s112 = sphi 0, %s110
    %s113 = sphi 0, %s112
    %s127 = sphi 0, %s113
    %s131 = sphi 0, %s131
    %s133 = sphi 0, %s131
    %s134 = sphi 0, %s133
    %s148 = sphi 0, %s134
    %s152 = sphi 0, %s152
    %s154 = sphi 0, %s152
    %s155 = sphi 0, %s154
    %s169 = sphi 0, %s155
    %s173 = sphi 0, %s173
    %s175 = sphi 0, %s173
    %s176 = sphi 0, %s175
    %s190 = sphi 0, %s176
    %s194 = sphi 0, %s194
    %s196 = sphi 0, %s194
    %s197 = sphi 0, %s196
    %s211 = sphi 0, %s197
    %s215 = sphi 0, %s215
    %s217 = sphi 0, %s215
    %s218 = sphi 0, %s217
    %s232 = sphi 0, %s218
    %s236 = sphi 0, %s236
    %s238 = sphi 0, %s236
    %s239 = sphi 0, %s238
    %s253 = sphi 0, %s239
    %s257 = sphi 0, %s257
    %s259 = sphi 0, %s257
    %s260 = sphi 0, %s259
    %s274 = sphi 0, %s260
    %s278 = sphi 0, %s278
    %s280 = sphi 0, %s278
    %s281 = sphi 0, %s280
    %s295 = sphi 0, %s281
    %s299 = sphi 0, %s299
    %s301 = sphi 0, %s299
    %s302 = sphi 0, %s301
    %s316 = sphi 0, %s302
    %s320 = sphi 0, %s320
    %s322 = sphi 0, %s320
    %s323 = sphi 0, %s322
    %s337 = sphi 0, %s323
    %s341 = sphi 0, %s341
    %s343 = sphi 0, %s341
    %s344 = sphi 0, %s343
    %s358 = sphi 0, %s344
    %s362 = sphi 0, %s362
    %s364 = sphi 0, %s362
    %s365 = sphi 0, %s364
    %s379 = sphi 0, %s365
    %s387 = sphi 0, %s389
    %s390 = sphi 0, %s387
    %s391 = sphi 0, %s390
    %s407 = sphi 0, %s391
  $region4: #{cnn1d_forward.1} parent=0 // loop_header_branch
    %25 = sbr.rel (%p23) target = $region8
  $region5: #{cnn1d_forward.1} parent=0 // loop_body
    %s27 = ssub.s32 %s22, 1
    %s28 = ssub.s32 %s22, 2
    %s35 = sadd.s32 1, %s30
    %p36 = scmp.ge.s32.totalorder %s35, 1
    %s37 = scalar_select %p36, 0, %s35
    %s38 = sadd.s32 1, %s29
    %s39 = scalar_select %p36, %s38, %s29
    %p40 = scmp.ge.s32.totalorder %s39, 2
    %s41 = scalar_select %p40, 0, %s39
    %s42 = ssub.s32 %s29, %s41
    %p43 = scmp.eq.s32.totalorder %s42, 0
    %s45 = sadd.s32 %s44, 1
    %s46 = scalar_select %p43, %s44, %s45
    %p49 = pneg %p43
    %p50 = scmp.eq.s32.totalorder %s22, 1
    %p51 = por %p49, %p50
    %p52 = scmp.ne.s32.totalorder %s44, %s47
    %p53 = scmp.eq.s32.totalorder %s22, 0
    %p54 = por %p52, %p53
    %p55 = scmp.ne.s32.totalorder %s44, %s47
    %p56 = scmp.eq.s32.totalorder %s27, 1
    %p57 = por %p55, %p56
    %p58 = scmp.ne.s32.totalorder %s47, %s48
    %p59 = scmp.eq.s32.totalorder %s27, 0
    %p60 = por %p58, %p59
    %p61 = scmp.ne.s32.totalorder %s47, %s48
    %p62 = scmp.eq.s32.totalorder %s28, 1
    %p63 = por %p61, %p62
    %p65 = scmp.ne.s32.totalorder %s48, %s64
    %p66 = scmp.eq.s32.totalorder %s28, 0
    %p67 = por %p65, %p66
    %s69 = sadd.s32 %s68, 1
    %p72 = scmp.eq.s32.totalorder %s22, 1
    %p73 = scmp.ne.s32.totalorder %s68, %s70
    %p74 = scmp.eq.s32.totalorder %s22, 0
    %p75 = por %p73, %p74
    %p76 = scmp.ne.s32.totalorder %s68, %s70
    %p77 = scmp.eq.s32.totalorder %s27, 1
    %p78 = por %p76, %p77
    %p79 = scmp.ne.s32.totalorder %s70, %s71
    %p80 = scmp.eq.s32.totalorder %s27, 0
    %p81 = por %p79, %p80
    %p82 = scmp.ne.s32.totalorder %s70, %s71
    %p83 = scmp.eq.s32.totalorder %s28, 1
    %p84 = por %p82, %p83
    %p86 = scmp.ne.s32.totalorder %s71, %s85
    %p87 = scmp.eq.s32.totalorder %s28, 0
    %p88 = por %p86, %p87
    %s90 = sadd.s32 %s89, 1
    %p93 = scmp.eq.s32.totalorder %s22, 1
    %p94 = scmp.ne.s32.totalorder %s89, %s91
    %p95 = scmp.eq.s32.totalorder %s22, 0
    %p96 = por %p94, %p95
    %p97 = scmp.ne.s32.totalorder %s89, %s91
    %p98 = scmp.eq.s32.totalorder %s27, 1
    %p99 = por %p97, %p98
    %p100 = scmp.ne.s32.totalorder %s91, %s92
    %p101 = scmp.eq.s32.totalorder %s27, 0
    %p102 = por %p100, %p101
    %p103 = scmp.ne.s32.totalorder %s91, %s92
    %p104 = scmp.eq.s32.totalorder %s28, 1
    %p105 = por %p103, %p104
    %p107 = scmp.ne.s32.totalorder %s92, %s106
    %p108 = scmp.eq.s32.totalorder %s28, 0
    %p109 = por %p107, %p108
    %s111 = sadd.s32 %s110, 1
    %p114 = scmp.eq.s32.totalorder %s22, 1
    %p115 = scmp.ne.s32.totalorder %s110, %s112
    %p116 = scmp.eq.s32.totalorder %s22, 0
    %p117 = por %p115, %p116
    %p118 = scmp.ne.s32.totalorder %s110, %s112
    %p119 = scmp.eq.s32.totalorder %s27, 1
    %p120 = por %p118, %p119
    %p121 = scmp.ne.s32.totalorder %s112, %s113
    %p122 = scmp.eq.s32.totalorder %s27, 0
    %p123 = por %p121, %p122
    %p124 = scmp.ne.s32.totalorder %s112, %s113
    %p125 = scmp.eq.s32.totalorder %s28, 1
    %p126 = por %p124, %p125
    %p128 = scmp.ne.s32.totalorder %s113, %s127
    %p129 = scmp.eq.s32.totalorder %s28, 0
    %p130 = por %p128, %p129
    %s132 = sadd.s32 %s131, 1
    %p135 = scmp.eq.s32.totalorder %s22, 1
    %p136 = scmp.ne.s32.totalorder %s131, %s133
    %p137 = scmp.eq.s32.totalorder %s22, 0
    %p138 = por %p136, %p137
    %p139 = scmp.ne.s32.totalorder %s131, %s133
    %p140 = scmp.eq.s32.totalorder %s27, 1
    %p141 = por %p139, %p140
    %p142 = scmp.ne.s32.totalorder %s133, %s134
    %p143 = scmp.eq.s32.totalorder %s27, 0
    %p144 = por %p142, %p143
    %p145 = scmp.ne.s32.totalorder %s133, %s134
    %p146 = scmp.eq.s32.totalorder %s28, 1
    %p147 = por %p145, %p146
    %p149 = scmp.ne.s32.totalorder %s134, %s148
    %p150 = scmp.eq.s32.totalorder %s28, 0
    %p151 = por %p149, %p150
    %s153 = sadd.s32 %s152, 1
    %p156 = scmp.eq.s32.totalorder %s22, 1
    %p157 = scmp.ne.s32.totalorder %s152, %s154
    %p158 = scmp.eq.s32.totalorder %s22, 0
    %p159 = por %p157, %p158
    %p160 = scmp.ne.s32.totalorder %s152, %s154
    %p161 = scmp.eq.s32.totalorder %s27, 1
    %p162 = por %p160, %p161
    %p163 = scmp.ne.s32.totalorder %s154, %s155
    %p164 = scmp.eq.s32.totalorder %s27, 0
    %p165 = por %p163, %p164
    %p166 = scmp.ne.s32.totalorder %s154, %s155
    %p167 = scmp.eq.s32.totalorder %s28, 1
    %p168 = por %p166, %p167
    %p170 = scmp.ne.s32.totalorder %s155, %s169
    %p171 = scmp.eq.s32.totalorder %s28, 0
    %p172 = por %p170, %p171
    %s174 = sadd.s32 %s173, 1
    %p177 = scmp.eq.s32.totalorder %s22, 1
    %p178 = scmp.ne.s32.totalorder %s173, %s175
    %p179 = scmp.eq.s32.totalorder %s22, 0
    %p180 = por %p178, %p179
    %p181 = scmp.ne.s32.totalorder %s173, %s175
    %p182 = scmp.eq.s32.totalorder %s27, 1
    %p183 = por %p181, %p182
    %p184 = scmp.ne.s32.totalorder %s175, %s176
    %p185 = scmp.eq.s32.totalorder %s27, 0
    %p186 = por %p184, %p185
    %p187 = scmp.ne.s32.totalorder %s175, %s176
    %p188 = scmp.eq.s32.totalorder %s28, 1
    %p189 = por %p187, %p188
    %p191 = scmp.ne.s32.totalorder %s176, %s190
    %p192 = scmp.eq.s32.totalorder %s28, 0
    %p193 = por %p191, %p192
    %s195 = sadd.s32 %s194, 1
    %p198 = scmp.eq.s32.totalorder %s22, 1
    %p199 = scmp.ne.s32.totalorder %s194, %s196
    %p200 = scmp.eq.s32.totalorder %s22, 0
    %p201 = por %p199, %p200
    %p202 = scmp.ne.s32.totalorder %s194, %s196
    %p203 = scmp.eq.s32.totalorder %s27, 1
    %p204 = por %p202, %p203
    %p205 = scmp.ne.s32.totalorder %s196, %s197
    %p206 = scmp.eq.s32.totalorder %s27, 0
    %p207 = por %p205, %p206
    %p208 = scmp.ne.s32.totalorder %s196, %s197
    %p209 = scmp.eq.s32.totalorder %s28, 1
    %p210 = por %p208, %p209
    %p212 = scmp.ne.s32.totalorder %s197, %s211
    %p213 = scmp.eq.s32.totalorder %s28, 0
    %p214 = por %p212, %p213
    %s216 = sadd.s32 %s215, 1
    %p219 = scmp.eq.s32.totalorder %s22, 1
    %p220 = scmp.ne.s32.totalorder %s215, %s217
    %p221 = scmp.eq.s32.totalorder %s22, 0
    %p222 = por %p220, %p221
    %p223 = scmp.ne.s32.totalorder %s215, %s217
    %p224 = scmp.eq.s32.totalorder %s27, 1
    %p225 = por %p223, %p224
    %p226 = scmp.ne.s32.totalorder %s217, %s218
    %p227 = scmp.eq.s32.totalorder %s27, 0
    %p228 = por %p226, %p227
    %p229 = scmp.ne.s32.totalorder %s217, %s218
    %p230 = scmp.eq.s32.totalorder %s28, 1
    %p231 = por %p229, %p230
    %p233 = scmp.ne.s32.totalorder %s218, %s232
    %p234 = scmp.eq.s32.totalorder %s28, 0
    %p235 = por %p233, %p234
    %s237 = sadd.s32 %s236, 1
    %p240 = scmp.eq.s32.totalorder %s22, 1
    %p241 = scmp.ne.s32.totalorder %s236, %s238
    %p242 = scmp.eq.s32.totalorder %s22, 0
    %p243 = por %p241, %p242
    %p244 = scmp.ne.s32.totalorder %s236, %s238
    %p245 = scmp.eq.s32.totalorder %s27, 1
    %p246 = por %p244, %p245
    %p247 = scmp.ne.s32.totalorder %s238, %s239
    %p248 = scmp.eq.s32.totalorder %s27, 0
    %p249 = por %p247, %p248
    %p250 = scmp.ne.s32.totalorder %s238, %s239
    %p251 = scmp.eq.s32.totalorder %s28, 1
    %p252 = por %p250, %p251
    %p254 = scmp.ne.s32.totalorder %s239, %s253
    %p255 = scmp.eq.s32.totalorder %s28, 0
    %p256 = por %p254, %p255
    %s258 = sadd.s32 %s257, 1
    %p261 = scmp.eq.s32.totalorder %s22, 1
    %p262 = scmp.ne.s32.totalorder %s257, %s259
    %p263 = scmp.eq.s32.totalorder %s22, 0
    %p264 = por %p262, %p263
    %p265 = scmp.ne.s32.totalorder %s257, %s259
    %p266 = scmp.eq.s32.totalorder %s27, 1
    %p267 = por %p265, %p266
    %p268 = scmp.ne.s32.totalorder %s259, %s260
    %p269 = scmp.eq.s32.totalorder %s27, 0
    %p270 = por %p268, %p269
    %p271 = scmp.ne.s32.totalorder %s259, %s260
    %p272 = scmp.eq.s32.totalorder %s28, 1
    %p273 = por %p271, %p272
    %p275 = scmp.ne.s32.totalorder %s260, %s274
    %p276 = scmp.eq.s32.totalorder %s28, 0
    %p277 = por %p275, %p276
    %s279 = sadd.s32 %s278, 1
    %p282 = scmp.eq.s32.totalorder %s22, 1
    %p283 = scmp.ne.s32.totalorder %s278, %s280
    %p284 = scmp.eq.s32.totalorder %s22, 0
    %p285 = por %p283, %p284
    %p286 = scmp.ne.s32.totalorder %s278, %s280
    %p287 = scmp.eq.s32.totalorder %s27, 1
    %p288 = por %p286, %p287
    %p289 = scmp.ne.s32.totalorder %s280, %s281
    %p290 = scmp.eq.s32.totalorder %s27, 0
    %p291 = por %p289, %p290
    %p292 = scmp.ne.s32.totalorder %s280, %s281
    %p293 = scmp.eq.s32.totalorder %s28, 1
    %p294 = por %p292, %p293
    %p296 = scmp.ne.s32.totalorder %s281, %s295
    %p297 = scmp.eq.s32.totalorder %s28, 0
    %p298 = por %p296, %p297
    %s300 = sadd.s32 %s299, 1
    %p303 = scmp.eq.s32.totalorder %s22, 1
    %p304 = scmp.ne.s32.totalorder %s299, %s301
    %p305 = scmp.eq.s32.totalorder %s22, 0
    %p306 = por %p304, %p305
    %p307 = scmp.ne.s32.totalorder %s299, %s301
    %p308 = scmp.eq.s32.totalorder %s27, 1
    %p309 = por %p307, %p308
    %p310 = scmp.ne.s32.totalorder %s301, %s302
    %p311 = scmp.eq.s32.totalorder %s27, 0
    %p312 = por %p310, %p311
    %p313 = scmp.ne.s32.totalorder %s301, %s302
    %p314 = scmp.eq.s32.totalorder %s28, 1
    %p315 = por %p313, %p314
    %p317 = scmp.ne.s32.totalorder %s302, %s316
    %p318 = scmp.eq.s32.totalorder %s28, 0
    %p319 = por %p317, %p318
    %s321 = sadd.s32 %s320, 1
    %p324 = scmp.eq.s32.totalorder %s22, 1
    %p325 = scmp.ne.s32.totalorder %s320, %s322
    %p326 = scmp.eq.s32.totalorder %s22, 0
    %p327 = por %p325, %p326
    %p328 = scmp.ne.s32.totalorder %s320, %s322
    %p329 = scmp.eq.s32.totalorder %s27, 1
    %p330 = por %p328, %p329
    %p331 = scmp.ne.s32.totalorder %s322, %s323
    %p332 = scmp.eq.s32.totalorder %s27, 0
    %p333 = por %p331, %p332
    %p334 = scmp.ne.s32.totalorder %s322, %s323
    %p335 = scmp.eq.s32.totalorder %s28, 1
    %p336 = por %p334, %p335
    %p338 = scmp.ne.s32.totalorder %s323, %s337
    %p339 = scmp.eq.s32.totalorder %s28, 0
    %p340 = por %p338, %p339
    %s342 = sadd.s32 %s341, 1
    %p345 = scmp.eq.s32.totalorder %s22, 1
    %p346 = scmp.ne.s32.totalorder %s341, %s343
    %p347 = scmp.eq.s32.totalorder %s22, 0
    %p348 = por %p346, %p347
    %p349 = scmp.ne.s32.totalorder %s341, %s343
    %p350 = scmp.eq.s32.totalorder %s27, 1
    %p351 = por %p349, %p350
    %p352 = scmp.ne.s32.totalorder %s343, %s344
    %p353 = scmp.eq.s32.totalorder %s27, 0
    %p354 = por %p352, %p353
    %p355 = scmp.ne.s32.totalorder %s343, %s344
    %p356 = scmp.eq.s32.totalorder %s28, 1
    %p357 = por %p355, %p356
    %p359 = scmp.ne.s32.totalorder %s344, %s358
    %p360 = scmp.eq.s32.totalorder %s28, 0
    %p361 = por %p359, %p360
    %s363 = sadd.s32 %s362, 1
    %p366 = scmp.eq.s32.totalorder %s22, 1
    %p367 = scmp.ne.s32.totalorder %s362, %s364
    %p368 = scmp.eq.s32.totalorder %s22, 0
    %p369 = por %p367, %p368
    %p370 = scmp.ne.s32.totalorder %s362, %s364
    %p371 = scmp.eq.s32.totalorder %s27, 1
    %p372 = por %p370, %p371
    %p373 = scmp.ne.s32.totalorder %s364, %s365
    %p374 = scmp.eq.s32.totalorder %s27, 0
    %p375 = por %p373, %p374
    %p376 = scmp.ne.s32.totalorder %s364, %s365
    %p377 = scmp.eq.s32.totalorder %s28, 1
    %p378 = por %p376, %p377
    %p380 = scmp.ne.s32.totalorder %s365, %s379
    %p381 = scmp.eq.s32.totalorder %s28, 0
    %p382 = por %p380, %p381
    %s383 = ssub.s32 %s29, %s41
    %s384 = ssub.s32 %s30, %s37
    %s385 = sor.u32 %s383, %s384
    %p386 = scmp.eq.s32.totalorder %s385, 0
    %s388 = sadd.s32 %s387, 1
    %s389 = scalar_select %p386, %s387, %s388
    %p392 = pneg %p386
    %p393 = scmp.eq.s32.totalorder %s22, 1
    %p394 = por %p392, %p393
    %p395 = scmp.ne.s32.totalorder %s387, %s390
    %p396 = scmp.eq.s32.totalorder %s22, 0
    %p397 = por %p395, %p396
    %p398 = scmp.ne.s32.totalorder %s387, %s390
    %p399 = scmp.eq.s32.totalorder %s27, 1
    %p400 = por %p398, %p399
    %p401 = scmp.ne.s32.totalorder %s390, %s391
    %p402 = scmp.eq.s32.totalorder %s27, 0
    %p403 = por %p401, %p402
    %p404 = scmp.ne.s32.totalorder %s390, %s391
    %p405 = scmp.eq.s32.totalorder %s28, 1
    %p406 = por %p404, %p405
    %p408 = scmp.ne.s32.totalorder %s391, %s407
    %p409 = scmp.eq.s32.totalorder %s28, 0
    %p410 = por %p408, %p409
    %p411 = scmp.le.s32.totalorder 1, %s22
    %p412 = scmp.lt.s32.totalorder %s22, 3
    %p413 = pnand %p411, %p412
    %p414 = pneg %p413
    // Predicated region
    $region9: #{cnn1d_forward.1} parent=5 // pred_check
      _
    $region10: #{cnn1d_forward.1} parent=5 // pred_check_branch
      %416 = sbr.rel (%p413) target = $region12
    $region11: #{cnn1d_forward.1} parent=5 // pred_region
      %s417 = ssub.s32 %s22, 1
      // Predicated region
      $region13: #{cnn1d_forward.1} parent=11 // pred_check
        %p418 = pneg %p81
      $region14: #{cnn1d_forward.1} parent=11 // pred_check_branch
        %420 = sbr.rel (%p418) target = $region16
      $region15: #{cnn1d_forward.1} parent=11 // pred_region
        _
      $region16: #{cnn1d_forward.1} parent=11 // pred_fallthru
        _
      // Predicated region
      $region17: #{cnn1d_forward.1} parent=11 // pred_check
        %p421 = pneg %p102
      $region18: #{cnn1d_forward.1} parent=11 // pred_check_branch
        %423 = sbr.rel (%p421) target = $region20
      $region19: #{cnn1d_forward.1} parent=11 // pred_region
        _
      $region20: #{cnn1d_forward.1} parent=11 // pred_fallthru
        _
      // Predicated region
      $region21: #{cnn1d_forward.1} parent=11 // pred_check
        %p424 = pneg %p123
      $region22: #{cnn1d_forward.1} parent=11 // pred_check_branch
        %426 = sbr.rel (%p424) target = $region24
      $region23: #{cnn1d_forward.1} parent=11 // pred_region
        _
      $region24: #{cnn1d_forward.1} parent=11 // pred_fallthru
        _
      // Predicated region
      $region25: #{cnn1d_forward.1} parent=11 // pred_check
        %p427 = pneg %p144
      $region26: #{cnn1d_forward.1} parent=11 // pred_check_branch
        %429 = sbr.rel (%p427) target = $region28
      $region27: #{cnn1d_forward.1} parent=11 // pred_region
        _
      $region28: #{cnn1d_forward.1} parent=11 // pred_fallthru
        _
      // Predicated region
      $region29: #{cnn1d_forward.1} parent=11 // pred_check
        %p430 = pneg %p165
      $region30: #{cnn1d_forward.1} parent=11 // pred_check_branch
        %432 = sbr.rel (%p430) target = $region32
      $region31: #{cnn1d_forward.1} parent=11 // pred_region
        _
      $region32: #{cnn1d_forward.1} parent=11 // pred_fallthru
        _
      // Predicated region
      $region33: #{cnn1d_forward.1} parent=11 // pred_check
        %p433 = pneg %p186
      $region34: #{cnn1d_forward.1} parent=11 // pred_check_branch
        %435 = sbr.rel (%p433) target = $region36
      $region35: #{cnn1d_forward.1} parent=11 // pred_region
        _
      $region36: #{cnn1d_forward.1} parent=11 // pred_fallthru
        _
      // Predicated region
      $region37: #{cnn1d_forward.1} parent=11 // pred_check
        %p436 = pneg %p207
      $region38: #{cnn1d_forward.1} parent=11 // pred_check_branch
        %438 = sbr.rel (%p436) target = $region40
      $region39: #{cnn1d_forward.1} parent=11 // pred_region
        _
      $region40: #{cnn1d_forward.1} parent=11 // pred_fallthru
        _
      // Predicated region
      $region41: #{cnn1d_forward.1} parent=11 // pred_check
        %p439 = pneg %p228
      $region42: #{cnn1d_forward.1} parent=11 // pred_check_branch
        %441 = sbr.rel (%p439) target = $region44
      $region43: #{cnn1d_forward.1} parent=11 // pred_region
        _
      $region44: #{cnn1d_forward.1} parent=11 // pred_fallthru
        _
      // Predicated region
      $region45: #{cnn1d_forward.1} parent=11 // pred_check
        %p442 = pneg %p249
      $region46: #{cnn1d_forward.1} parent=11 // pred_check_branch
        %444 = sbr.rel (%p442) target = $region48
      $region47: #{cnn1d_forward.1} parent=11 // pred_region
        _
      $region48: #{cnn1d_forward.1} parent=11 // pred_fallthru
        _
      // Predicated region
      $region49: #{cnn1d_forward.1} parent=11 // pred_check
        %p445 = pneg %p270
      $region50: #{cnn1d_forward.1} parent=11 // pred_check_branch
        %447 = sbr.rel (%p445) target = $region52
      $region51: #{cnn1d_forward.1} parent=11 // pred_region
        _
      $region52: #{cnn1d_forward.1} parent=11 // pred_fallthru
        _
      // Predicated region
      $region53: #{cnn1d_forward.1} parent=11 // pred_check
        %p448 = pneg %p291
      $region54: #{cnn1d_forward.1} parent=11 // pred_check_branch
        %450 = sbr.rel (%p448) target = $region56
      $region55: #{cnn1d_forward.1} parent=11 // pred_region
        _
      $region56: #{cnn1d_forward.1} parent=11 // pred_fallthru
        _
      // Predicated region
      $region57: #{cnn1d_forward.1} parent=11 // pred_check
        %p451 = pneg %p312
      $region58: #{cnn1d_forward.1} parent=11 // pred_check_branch
        %453 = sbr.rel (%p451) target = $region60
      $region59: #{cnn1d_forward.1} parent=11 // pred_region
        _
      $region60: #{cnn1d_forward.1} parent=11 // pred_fallthru
        _
      // Predicated region
      $region61: #{cnn1d_forward.1} parent=11 // pred_check
        %p454 = pneg %p333
      $region62: #{cnn1d_forward.1} parent=11 // pred_check_branch
        %456 = sbr.rel (%p454) target = $region64
      $region63: #{cnn1d_forward.1} parent=11 // pred_region
        _
      $region64: #{cnn1d_forward.1} parent=11 // pred_fallthru
        _
      // Predicated region
      $region65: #{cnn1d_forward.1} parent=11 // pred_check
        %p457 = pneg %p354
      $region66: #{cnn1d_forward.1} parent=11 // pred_check_branch
        %459 = sbr.rel (%p457) target = $region68
      $region67: #{cnn1d_forward.1} parent=11 // pred_region
        _
      $region68: #{cnn1d_forward.1} parent=11 // pred_fallthru
        _
      // Predicated region
      $region69: #{cnn1d_forward.1} parent=11 // pred_check
        %p460 = pneg %p375
      $region70: #{cnn1d_forward.1} parent=11 // pred_check_branch
        %462 = sbr.rel (%p460) target = $region72
      $region71: #{cnn1d_forward.1} parent=11 // pred_region
        _
      $region72: #{cnn1d_forward.1} parent=11 // pred_fallthru
        _
    $region12: #{cnn1d_forward.1} parent=5 // pred_fallthru
      _
    %p463 = scmp.lt.s32.totalorder %s22, 2
    // Predicated region
    $region73: #{cnn1d_forward.1} parent=5 // pred_check
      %p464 = pneg %p463
    $region74: #{cnn1d_forward.1} parent=5 // pred_check_branch
      %466 = sbr.rel (%p464) target = $region76
    $region75: #{cnn1d_forward.1} parent=5 // pred_region
      // Predicated region
      $region77: #{cnn1d_forward.1} parent=75 // pred_check
        %p467 = pneg %p54
      $region78: #{cnn1d_forward.1} parent=75 // pred_check_branch
        %469 = sbr.rel (%p467) target = $region80
      $region79: #{cnn1d_forward.1} parent=75 // pred_region
        %p470 = scmp.lt.s32.totalorder %s29, 1
        %s471 = scalar_select %p470, %s29, 1
        %s472 = smul.addr %s471, 6
        %s473 = smul.addr %s472, 8
        %s474 = scalar_lea.vmem %s0, %s473
      $region80: #{cnn1d_forward.1} parent=75 // pred_fallthru
        _
    $region76: #{cnn1d_forward.1} parent=5 // pred_fallthru
      _
    %p475 = scmp.le.s32.totalorder 1, %s22
    %p476 = scmp.lt.s32.totalorder %s22, 3
    %p477 = pnand %p475, %p476
    %p478 = pneg %p477
    // Predicated region
    $region81: #{cnn1d_forward.1} parent=5 // pred_check
      _
    $region82: #{cnn1d_forward.1} parent=5 // pred_check_branch
      %480 = sbr.rel (%p477) target = $region84
    $region83: #{cnn1d_forward.1} parent=5 // pred_region
      %s481 = ssub.s32 %s22, 1
      %p482 = scmp.lt.s32.totalorder %s31, 1
      %s483 = scalar_select %p482, %s31, 1
      %s484 = smul.addr %s483, 6
      %s485 = smul.addr %s484, 8
      %s486 = scalar_lea.vmem %s0, %s485
      %p487 = pneg %p60
      %p488 = pneg %p57
      %p489 = pneg %p81
      %p490 = pneg %p78
      %p491 = pneg %p102
      %p492 = pneg %p99
      %p493 = pneg %p123
      %p494 = pneg %p120
      %p495 = pneg %p144
      %p496 = pneg %p141
      %p497 = pneg %p165
      %p498 = pneg %p162
      %p499 = pneg %p186
      %p500 = pneg %p183
      %p501 = pneg %p207
      %p502 = pneg %p204
      %p503 = pneg %p228
      %p504 = pneg %p225
      %p505 = pneg %p249
      %p506 = pneg %p246
      %p507 = pneg %p270
      %p508 = pneg %p267
      %p509 = pneg %p291
      %p510 = pneg %p288
      %p511 = pneg %p312
      %p512 = pneg %p309
      %p513 = pneg %p333
      %p514 = pneg %p330
      %p515 = pneg %p354
      %p516 = pneg %p351
      %p517 = pneg %p375
      %p518 = pneg %p372
      %p519 = pneg %p403
      %p520 = pneg %p400
      %s521 = smul.u32 2, %s32
      %p522 = scmp.lt.s32.totalorder %s31, 1
      %s523 = scalar_select %p522, %s31, 1
      %p524 = scmp.lt.s32.totalorder %s521, 1
      %s525 = scalar_select %p524, %s521, 1
      %s526 = smul.addr %s523, 2
      %s527 = sadd.s32 %s525, %s526
      %s528 = smul.addr %s527, 8
      %s529 = scalar_lea.vmem %s16, %s528
      %p530 = scmp.lt.s32.totalorder %s31, 1
      %s531 = scalar_select %p530, %s31, 1
      %s532 = smul.addr %s531, 6
      %s533 = smul.addr %s532, 8
      %s534 = scalar_lea.vmem %s0, %s533
      %s535 = smul.u32 2, %s32
      %p536 = scmp.lt.s32.totalorder %s31, 1
      %s537 = scalar_select %p536, %s31, 1
      %p538 = scmp.lt.s32.totalorder %s535, 1
      %s539 = scalar_select %p538, %s535, 1
      %s540 = smul.addr %s537, 2
      %s541 = sadd.s32 %s539, %s540
      %s542 = smul.addr %s541, 8
      %s543 = scalar_lea.vmem %s16, %s542
      %s544 = smul.u32 2, %s32
      %s545 = smul.u32 %s32, 16
      %s546 = scalar_lea.vmem %s534, %s545
      %v547 = vld [vmem:[%s546] sm:$0xff]
      %v548 = vld [vmem:[%s546 + $0x8] sm:$0xff]
      %v549 = vld [vmem:[%s546 + $0x10] sm:$0xff]
      %v550 = vld [vmem:[%s546 + $0x18] sm:$0xff]
      %v551 = vld [vmem:[%s546 + $0x20] sm:$0xff]
      %v552 = vld [vmem:[%s546 + $0x28] sm:$0xf]
      %v553 = vld [vmem:[%s1] sm:$0xf]
      %s554 = scalar_lea.vmem %s1, 4
      %v555 = vld [vmem:[%s554] sm:$0xf]
      %vm562 = vcmask 1046528
      %v563 = vrot.slane %v547, 1
      %v564 = vrot.slane %v548, 1
      %v565 = vsel %vm562, %v563, %v564
      %v566 = vrot.slane %v549, 1
      %v567 = vsel %vm562, %v564, %v566
      %v568 = vrot.slane %v550, 1
      %v569 = vsel %vm562, %v566, %v568
      %v570 = vrot.slane %v551, 1
      %v571 = vsel %vm562, %v568, %v570
      %v572 = vrot.slane %v552, 1
      %v573 = vsel %vm562, %v570, %v572
      %vm574 = vcmask 31744
      %v575 = vsel %vm574, %v565, 0
      %v577 = vsel %vm574, %v567, 0
      %v579 = vsel %vm574, %v569, 0
      %v581 = vsel %vm574, %v571, 0
      %v583 = vsel %vm574, %v573, 0
      %vm585 = vcmask 1043456
      %v587 = vsel %vm585, %v555, 0
      %589 = vmatpush.msra.mxu0 0.0
      %590 = vmatpush.msra.mxu0 0.0
      %591 = vmatpush.msra.mxu0 0.0
      %592 = vmatpush.msra.mxu0 0.0
      %593 = vmatpush.msra.mxu0 0.0
      %594 = vmatpush.msra.mxu0 0.0
      %595 = vmatpush.msra.mxu0 0.0
      %596 = vmatpush.msra.mxu0 0.0
      %597 = vmatpush.msra.mxu0 0.0
      %598 = vmatpush.msra.mxu0 0.0
      %599 = vmatpush.msra.mxu0 0.0
      %600 = vmatpush.msra.mxu0 0.0
      %601 = vmatpush.msra.mxu0 0.0
      %602 = vmatpush.msra.mxu0 0.0
      %603 = vmatpush.msra.mxu0 0.0
      %604 = vmatpush.msra.mxu0 %v587
      %605 = vmatmul.f32.gmra.mxu0 %v575
      %v606 = vpop.f32.mrf.mxu0
      %v607 = vadd.f32 0.0, %v606
      %608 = vmatmul.f32.gmra.mxu0 %v577
      %v609 = vpop.f32.mrf.mxu0
      %v610 = vadd.f32 0.0, %v609
      %611 = vmatmul.f32.gmra.mxu0 %v579
      %v612 = vpop.f32.mrf.mxu0
      %v613 = vadd.f32 0.0, %v612
      %614 = vmatmul.f32.gmra.mxu0 %v581
      %v615 = vpop.f32.mrf.mxu0
      %v616 = vadd.f32 0.0, %v615
      %617 = vmatmul.f32.gmra.mxu0 %v583
      %v618 = vpop.f32.mrf.mxu0
      %v619 = vadd.f32 0.0, %v618
      %620 = vdwg.mxu0
      %v621 = vsel %vm574, %v547, 0
      %v623 = vsel %vm574, %v548, 0
      %v625 = vsel %vm574, %v549, 0
      %v627 = vsel %vm574, %v550, 0
      %v629 = vsel %vm574, %v551, 0
      %v632 = vsel %vm585, %v553, 0
      %634 = vmatpush.msra.mxu0 0.0
      %635 = vmatpush.msra.mxu0 0.0
      %636 = vmatpush.msra.mxu0 0.0
      %637 = vmatpush.msra.mxu0 0.0
      %638 = vmatpush.msra.mxu0 0.0
      %639 = vmatpush.msra.mxu0 0.0
      %640 = vmatpush.msra.mxu0 0.0
      %641 = vmatpush.msra.mxu0 0.0
      %642 = vmatpush.msra.mxu0 0.0
      %643 = vmatpush.msra.mxu0 0.0
      %644 = vmatpush.msra.mxu0 0.0
      %645 = vmatpush.msra.mxu0 0.0
      %646 = vmatpush.msra.mxu0 0.0
      %647 = vmatpush.msra.mxu0 0.0
      %648 = vmatpush.msra.mxu0 0.0
      %649 = vmatpush.msra.mxu0 %v632
      %650 = vmatmul.f32.gmra.mxu0 %v621
      %v651 = vpop.f32.mrf.mxu0
      %v652 = vadd.f32 %v607, %v651
      %653 = vmatmul.f32.gmra.mxu0 %v623
      %v654 = vpop.f32.mrf.mxu0
      %v655 = vadd.f32 %v610, %v654
      %656 = vmatmul.f32.gmra.mxu0 %v625
      %v657 = vpop.f32.mrf.mxu0
      %v658 = vadd.f32 %v613, %v657
      %659 = vmatmul.f32.gmra.mxu0 %v627
      %v660 = vpop.f32.mrf.mxu0
      %v661 = vadd.f32 %v616, %v660
      %662 = vmatmul.f32.gmra.mxu0 %v629
      %v663 = vpop.f32.mrf.mxu0
      %v664 = vadd.f32 %v619, %v663
      %665 = vdwg.mxu0
      %s666 = scalar_lea.vmem %s1, 8
      %v667 = vld [vmem:[%s666] sm:$0xf]
      %vm668 = vcmask 1045504
      %v669 = vrot.slane %v547, 2
      %v670 = vrot.slane %v548, 2
      %v671 = vsel %vm668, %v669, %v670
      %v672 = vrot.slane %v549, 2
      %v673 = vsel %vm668, %v670, %v672
      %v674 = vrot.slane %v550, 2
      %v675 = vsel %vm668, %v672, %v674
      %v676 = vrot.slane %v551, 2
      %v677 = vsel %vm668, %v674, %v676
      %v678 = vrot.slane %v552, 2
      %v679 = vsel %vm668, %v676, %v678
      %v680 = vsel %vm574, %v671, 0
      %v682 = vsel %vm574, %v673, 0
      %v684 = vsel %vm574, %v675, 0
      %v686 = vsel %vm574, %v677, 0
      %v688 = vsel %vm574, %v679, 0
      %v691 = vsel %vm585, %v667, 0
      %693 = vmatpush.msra.mxu0 0.0
      %694 = vmatpush.msra.mxu0 0.0
      %695 = vmatpush.msra.mxu0 0.0
      %696 = vmatpush.msra.mxu0 0.0
      %697 = vmatpush.msra.mxu0 0.0
      %698 = vmatpush.msra.mxu0 0.0
      %699 = vmatpush.msra.mxu0 0.0
      %700 = vmatpush.msra.mxu0 0.0
      %701 = vmatpush.msra.mxu0 0.0
      %702 = vmatpush.msra.mxu0 0.0
      %703 = vmatpush.msra.mxu0 0.0
      %704 = vmatpush.msra.mxu0 0.0
      %705 = vmatpush.msra.mxu0 0.0
      %706 = vmatpush.msra.mxu0 0.0
      %707 = vmatpush.msra.mxu0 0.0
      %708 = vmatpush.msra.mxu0 %v691
      %709 = vmatmul.f32.gmra.mxu0 %v680
      %v710 = vpop.f32.mrf.mxu0
      %v711 = vadd.f32 0.0, %v710
      %712 = vmatmul.f32.gmra.mxu0 %v682
      %v713 = vpop.f32.mrf.mxu0
      %v714 = vadd.f32 0.0, %v713
      %715 = vmatmul.f32.gmra.mxu0 %v684
      %v716 = vpop.f32.mrf.mxu0
      %v717 = vadd.f32 0.0, %v716
      %718 = vmatmul.f32.gmra.mxu0 %v686
      %v719 = vpop.f32.mrf.mxu0
      %v720 = vadd.f32 0.0, %v719
      %721 = vmatmul.f32.gmra.mxu0 %v688
      %v722 = vpop.f32.mrf.mxu0
      %v723 = vadd.f32 0.0, %v722
      %724 = vdwg.mxu0
      %v725 = vadd.f32 %v652, %v711
      %v726 = vadd.f32 %v655, %v714
      %v727 = vadd.f32 %v658, %v717
      %v728 = vadd.f32 %v661, %v720
      %v729 = vadd.f32 %v664, %v723
      %s730 = scalar_lea.vmem %s1, 12
      %v731 = vld [vmem:[%s730] sm:$0xf]
      %vm732 = vcmask 1044480
      %v733 = vrot.slane %v547, 3
      %v734 = vrot.slane %v548, 3
      %v735 = vsel %vm732, %v733, %v734
      %v736 = vrot.slane %v549, 3
      %v737 = vsel %vm732, %v734, %v736
      %v738 = vrot.slane %v550, 3
      %v739 = vsel %vm732, %v736, %v738
      %v740 = vrot.slane %v551, 3
      %v741 = vsel %vm732, %v738, %v740
      %v742 = vrot.slane %v552, 3
      %v743 = vsel %vm732, %v740, %v742
      %v744 = vsel %vm574, %v735, 0
      %v746 = vsel %vm574, %v737, 0
      %v748 = vsel %vm574, %v739, 0
      %v750 = vsel %vm574, %v741, 0
      %v752 = vsel %vm574, %v743, 0
      %v755 = vsel %vm585, %v731, 0
      %757 = vmatpush.msra.mxu0 0.0
      %758 = vmatpush.msra.mxu0 0.0
      %759 = vmatpush.msra.mxu0 0.0
      %760 = vmatpush.msra.mxu0 0.0
      %761 = vmatpush.msra.mxu0 0.0
      %762 = vmatpush.msra.mxu0 0.0
      %763 = vmatpush.msra.mxu0 0.0
      %764 = vmatpush.msra.mxu0 0.0
      %765 = vmatpush.msra.mxu0 0.0
      %766 = vmatpush.msra.mxu0 0.0
      %767 = vmatpush.msra.mxu0 0.0
      %768 = vmatpush.msra.mxu0 0.0
      %769 = vmatpush.msra.mxu0 0.0
      %770 = vmatpush.msra.mxu0 0.0
      %771 = vmatpush.msra.mxu0 0.0
      %772 = vmatpush.msra.mxu0 %v755
      %773 = vmatmul.f32.gmra.mxu0 %v744
      %v774 = vpop.f32.mrf.mxu0
      %v775 = vadd.f32 0.0, %v774
      %776 = vmatmul.f32.gmra.mxu0 %v746
      %v777 = vpop.f32.mrf.mxu0
      %v778 = vadd.f32 0.0, %v777
      %779 = vmatmul.f32.gmra.mxu0 %v748
      %v780 = vpop.f32.mrf.mxu0
      %v781 = vadd.f32 0.0, %v780
      %782 = vmatmul.f32.gmra.mxu0 %v750
      %v783 = vpop.f32.mrf.mxu0
      %v784 = vadd.f32 0.0, %v783
      %785 = vmatmul.f32.gmra.mxu0 %v752
      %v786 = vpop.f32.mrf.mxu0
      %v787 = vadd.f32 0.0, %v786
      %788 = vdwg.mxu0
      %v789 = vadd.f32 %v725, %v775
      %v790 = vadd.f32 %v726, %v778
      %v791 = vadd.f32 %v727, %v781
      %v792 = vadd.f32 %v728, %v784
      %v793 = vadd.f32 %v729, %v787
      %s794 = scalar_lea.vmem %s1, 16
      %v795 = vld [vmem:[%s794] sm:$0xf]
      %v796 = vrot.slane %v547, 4
      %v797 = vrot.slane %v548, 4
      %v798 = vsel %vm585, %v796, %v797
      %v799 = vrot.slane %v549, 4
      %v800 = vsel %vm585, %v797, %v799
      %v801 = vrot.slane %v550, 4
      %v802 = vsel %vm585, %v799, %v801
      %v803 = vrot.slane %v551, 4
      %v804 = vsel %vm585, %v801, %v803
      %v805 = vrot.slane %v552, 4
      %v806 = vsel %vm585, %v803, %v805
      %v807 = vsel %vm574, %v798, 0
      %v809 = vsel %vm574, %v800, 0
      %v811 = vsel %vm574, %v802, 0
      %v813 = vsel %vm574, %v804, 0
      %v815 = vsel %vm574, %v806, 0
      %v818 = vsel %vm585, %v795, 0
      %820 = vmatpush.msra.mxu0 0.0
      %821 = vmatpush.msra.mxu0 0.0
      %822 = vmatpush.msra.mxu0 0.0
      %823 = vmatpush.msra.mxu0 0.0
      %824 = vmatpush.msra.mxu0 0.0
      %825 = vmatpush.msra.mxu0 0.0
      %826 = vmatpush.msra.mxu0 0.0
      %827 = vmatpush.msra.mxu0 0.0
      %828 = vmatpush.msra.mxu0 0.0
      %829 = vmatpush.msra.mxu0 0.0
      %830 = vmatpush.msra.mxu0 0.0
      %831 = vmatpush.msra.mxu0 0.0
      %832 = vmatpush.msra.mxu0 0.0
      %833 = vmatpush.msra.mxu0 0.0
      %834 = vmatpush.msra.mxu0 0.0
      %835 = vmatpush.msra.mxu0 %v818
      %836 = vmatmul.f32.gmra.mxu0 %v807
      %v837 = vpop.f32.mrf.mxu0
      %v838 = vadd.f32 0.0, %v837
      %839 = vmatmul.f32.gmra.mxu0 %v809
      %v840 = vpop.f32.mrf.mxu0
      %v841 = vadd.f32 0.0, %v840
      %842 = vmatmul.f32.gmra.mxu0 %v811
      %v843 = vpop.f32.mrf.mxu0
      %v844 = vadd.f32 0.0, %v843
      %845 = vmatmul.f32.gmra.mxu0 %v813
      %v846 = vpop.f32.mrf.mxu0
      %v847 = vadd.f32 0.0, %v846
      %848 = vmatmul.f32.gmra.mxu0 %v815
      %v849 = vpop.f32.mrf.mxu0
      %v850 = vadd.f32 0.0, %v849
      %851 = vdwg.mxu0
      %v852 = vadd.f32 %v789, %v838
      %v853 = vadd.f32 %v790, %v841
      %v854 = vadd.f32 %v791, %v844
      %v855 = vadd.f32 %v792, %v847
      %v856 = vadd.f32 %v793, %v850
      %v857 = vld [vmem:[%s2] sm:$0x1]
      %v859 = vperm.slane %v857, 0
      %v861 = vadd.f32 %v852, %v859
      %v862 = vadd.f32 %v853, %v859
      %v863 = vadd.f32 %v854, %v859
      %v864 = vadd.f32 %v855, %v859
      %v865 = vadd.f32 %v856, %v859
      %vm866 = vcmp.ge.f32.partialorder %v861, 0.0
      %vm867 = vcmp.ge.f32.partialorder %v862, 0.0
      %vm868 = vcmp.ge.f32.partialorder %v863, 0.0
      %vm869 = vcmp.ge.f32.partialorder %v864, 0.0
      %vm870 = vcmp.ge.f32.partialorder %v865, 0.0
      %v871 = vld [vmem:[%s3] sm:$0x1]
      %v873 = vperm.slane %v871, 0
      %v875 = vmul.f32 %v873, %v861
      %v876 = vmul.f32 %v873, %v862
      %v877 = vmul.f32 %v873, %v863
      %v878 = vmul.f32 %v873, %v864
      %v879 = vmul.f32 %v873, %v865
      %v880 = vsel %vm866, %v861, %v875
      %v881 = vsel %vm867, %v862, %v876
      %v882 = vsel %vm868, %v863, %v877
      %v883 = vsel %vm869, %v864, %v878
      %v884 = vsel %vm870, %v865, %v879
      %v885 = vlaneseq
      %v886 = vshrl.u32 %v885, 7
      %v887 = vadd.s32 %v886, 8
      %v888 = vadd.s32 %v886, 16
      %v889 = vadd.s32 %v886, 24
      %v890 = vadd.s32 %v886, 32
      %s891 = ssub.s32 24, %s545
      %v892 = vstv %s891
      %vm893 = vcmp.lt.s32.totalorder %v886, %v892
      %vm894 = vcmp.lt.s32.totalorder %v887, %v892
      %vm895 = vcmp.lt.s32.totalorder %v888, %v892
      %vm896 = vcmp.lt.s32.totalorder %v889, %v892
      %vm897 = vcmp.lt.s32.totalorder %v890, %v892
      %v898 = vsel %vm893, 1, 0
      %v899 = vsel %vm894, 1, 0
      %v900 = vsel %vm895, 1, 0
      %v901 = vsel %vm896, 1, 0
      %v902 = vsel %vm897, 1, 0
      %vm903 = vcmp.eq.s32.totalorder %v898, 1
      %vm904 = vcmp.eq.s32.totalorder %v899, 1
      %vm905 = vcmp.eq.s32.totalorder %v900, 1
      %vm906 = vcmp.eq.s32.totalorder %v901, 1
      %vm907 = vcmp.eq.s32.totalorder %v902, 1
      %v908 = vsel %vm903, 0.0, %v880
      %v909 = vsel %vm904, 0.0, %v881
      %v910 = vsel %vm905, 0.0, %v882
      %v911 = vsel %vm906, 0.0, %v883
      %v912 = vsel %vm907, 0.0, %v884
      %v913 = vld [vmem:[%s4] sm:$0xff]
      %v914 = vld [vmem:[%s4 + $0x8] sm:$0xff]
      %v915 = vld [vmem:[%s4 + $0x10] sm:$0xff]
      %v916 = vld [vmem:[%s4 + $0x18] sm:$0xff]
      %s917 = scalar_lea.vmem %s4, 32
      %v918 = vld [vmem:[%s917] sm:$0xff]
      %v919 = vld [vmem:[%s917 + $0x8] sm:$0xff]
      %v920 = vld [vmem:[%s917 + $0x10] sm:$0xff]
      %v921 = vld [vmem:[%s917 + $0x18] sm:$0xff]
      %v927 = vrot.slane %v908, 1
      %v928 = vrot.slane %v909, 1
      %v929 = vsel %vm562, %v927, %v928
      %v930 = vrot.slane %v910, 1
      %v931 = vsel %vm562, %v928, %v930
      %v932 = vrot.slane %v911, 1
      %v933 = vsel %vm562, %v930, %v932
      %v934 = vrot.slane %v912, 1
      %v935 = vsel %vm562, %v932, %v934
      %vm936 = vcmask 261120
      %v937 = vsel %vm936, %v929, 0
      %v939 = vsel %vm936, %v931, 0
      %v941 = vsel %vm936, %v933, 0
      %v943 = vsel %vm936, %v935, 0
      %v945 = vsel %vm936, %v934, 0
      %947 = vmatpush.msra.mxu0 0.0
      %948 = vmatpush.msra.mxu0 0.0
      %949 = vmatpush.msra.mxu0 0.0
      %950 = vmatpush.msra.mxu0 0.0
      %951 = vmatpush.msra.mxu0 0.0
      %952 = vmatpush.msra.mxu0 0.0
      %953 = vmatpush.msra.mxu0 0.0
      %954 = vmatpush.msra.mxu0 0.0
      %955 = vmatpush.msra.mxu0 0.0
      %956 = vmatpush.msra.mxu0 0.0
      %957 = vmatpush.msra.mxu0 0.0
      %958 = vmatpush.msra.mxu0 0.0
      %959 = vmatpush.msra.mxu0 %v921
      %960 = vmatpush.msra.mxu0 %v920
      %961 = vmatpush.msra.mxu0 %v919
      %962 = vmatpush.msra.mxu0 %v918
      %963 = vmatmul.f32.gmra.mxu0 %v937
      %v964 = vpop.f32.mrf.mxu0
      %v965 = vadd.f32 0.0, %v964
      %966 = vmatmul.f32.gmra.mxu0 %v939
      %v967 = vpop.f32.mrf.mxu0
      %v968 = vadd.f32 0.0, %v967
      %969 = vmatmul.f32.gmra.mxu0 %v941
      %v970 = vpop.f32.mrf.mxu0
      %v971 = vadd.f32 0.0, %v970
      %972 = vmatmul.f32.gmra.mxu0 %v943
      %v973 = vpop.f32.mrf.mxu0
      %v974 = vadd.f32 0.0, %v973
      %975 = vmatmul.f32.gmra.mxu0 %v945
      %v976 = vpop.f32.mrf.mxu0
      %v977 = vadd.f32 0.0, %v976
      %978 = vdwg.mxu0
      %v979 = vsel %vm936, %v908, 0
      %v981 = vsel %vm936, %v909, 0
      %v983 = vsel %vm936, %v910, 0
      %v985 = vsel %vm936, %v911, 0
      %v987 = vsel %vm936, %v912, 0
      %989 = vmatpush.msra.mxu0 0.0
      %990 = vmatpush.msra.mxu0 0.0
      %991 = vmatpush.msra.mxu0 0.0
      %992 = vmatpush.msra.mxu0 0.0
      %993 = vmatpush.msra.mxu0 0.0
      %994 = vmatpush.msra.mxu0 0.0
      %995 = vmatpush.msra.mxu0 0.0
      %996 = vmatpush.msra.mxu0 0.0
      %997 = vmatpush.msra.mxu0 0.0
      %998 = vmatpush.msra.mxu0 0.0
      %999 = vmatpush.msra.mxu0 0.0
      %1000 = vmatpush.msra.mxu0 0.0
      %1001 = vmatpush.msra.mxu0 %v916
      %1002 = vmatpush.msra.mxu0 %v915
      %1003 = vmatpush.msra.mxu0 %v914
      %1004 = vmatpush.msra.mxu0 %v913
      %1005 = vmatmul.f32.gmra.mxu0 %v979
      %v1006 = vpop.f32.mrf.mxu0
      %v1007 = vadd.f32 %v965, %v1006
      %1008 = vmatmul.f32.gmra.mxu0 %v981
      %v1009 = vpop.f32.mrf.mxu0
      %v1010 = vadd.f32 %v968, %v1009
      %1011 = vmatmul.f32.gmra.mxu0 %v983
      %v1012 = vpop.f32.mrf.mxu0
      %v1013 = vadd.f32 %v971, %v1012
      %1014 = vmatmul.f32.gmra.mxu0 %v985
      %v1015 = vpop.f32.mrf.mxu0
      %v1016 = vadd.f32 %v974, %v1015
      %1017 = vmatmul.f32.gmra.mxu0 %v987
      %v1018 = vpop.f32.mrf.mxu0
      %v1019 = vadd.f32 %v977, %v1018
      %1020 = vdwg.mxu0
      %s1021 = scalar_lea.vmem %s4, 64
      %v1022 = vld [vmem:[%s1021] sm:$0xff]
      %v1023 = vld [vmem:[%s1021 + $0x8] sm:$0xff]
      %v1024 = vld [vmem:[%s1021 + $0x10] sm:$0xff]
      %v1025 = vld [vmem:[%s1021 + $0x18] sm:$0xff]
      %v1026 = vrot.slane %v908, 2
      %v1027 = vrot.slane %v909, 2
      %v1028 = vsel %vm668, %v1026, %v1027
      %v1029 = vrot.slane %v910, 2
      %v1030 = vsel %vm668, %v1027, %v1029
      %v1031 = vrot.slane %v911, 2
      %v1032 = vsel %vm668, %v1029, %v1031
      %v1033 = vrot.slane %v912, 2
      %v1034 = vsel %vm668, %v1031, %v1033
      %v1035 = vsel %vm936, %v1028, 0
      %v1037 = vsel %vm936, %v1030, 0
      %v1039 = vsel %vm936, %v1032, 0
      %v1041 = vsel %vm936, %v1034, 0
      %v1043 = vsel %vm936, %v1033, 0
      %1045 = vmatpush.msra.mxu0 0.0
      %1046 = vmatpush.msra.mxu0 0.0
      %1047 = vmatpush.msra.mxu0 0.0
      %1048 = vmatpush.msra.mxu0 0.0
      %1049 = vmatpush.msra.mxu0 0.0
      %1050 = vmatpush.msra.mxu0 0.0
      %1051 = vmatpush.msra.mxu0 0.0
      %1052 = vmatpush.msra.mxu0 0.0
      %1053 = vmatpush.msra.mxu0 0.0
      %1054 = vmatpush.msra.mxu0 0.0
      %1055 = vmatpush.msra.mxu0 0.0
      %1056 = vmatpush.msra.mxu0 0.0
      %1057 = vmatpush.msra.mxu0 %v1025
      %1058 = vmatpush.msra.mxu0 %v1024
      %1059 = vmatpush.msra.mxu0 %v1023
      %1060 = vmatpush.msra.mxu0 %v1022
      %1061 = vmatmul.f32.gmra.mxu0 %v1035
      %v1062 = vpop.f32.mrf.mxu0
      %v1063 = vadd.f32 0.0, %v1062
      %1064 = vmatmul.f32.gmra.mxu0 %v1037
      %v1065 = vpop.f32.mrf.mxu0
      %v1066 = vadd.f32 0.0, %v1065
      %1067 = vmatmul.f32.gmra.mxu0 %v1039
      %v1068 = vpop.f32.mrf.mxu0
      %v1069 = vadd.f32 0.0, %v1068
      %1070 = vmatmul.f32.gmra.mxu0 %v1041
      %v1071 = vpop.f32.mrf.mxu0
      %v1072 = vadd.f32 0.0, %v1071
      %1073 = vmatmul.f32.gmra.mxu0 %v1043
      %v1074 = vpop.f32.mrf.mxu0
      %v1075 = vadd.f32 0.0, %v1074
      %1076 = vdwg.mxu0
      %v1077 = vadd.f32 %v1007, %v1063
      %v1078 = vadd.f32 %v1010, %v1066
      %v1079 = vadd.f32 %v1013, %v1069
      %v1080 = vadd.f32 %v1016, %v1072
      %v1081 = vadd.f32 %v1019, %v1075
      %s1082 = scalar_lea.vmem %s4, 96
      %v1083 = vld [vmem:[%s1082] sm:$0xff]
      %v1084 = vld [vmem:[%s1082 + $0x8] sm:$0xff]
      %v1085 = vld [vmem:[%s1082 + $0x10] sm:$0xff]
      %v1086 = vld [vmem:[%s1082 + $0x18] sm:$0xff]
      %v1087 = vrot.slane %v908, 3
      %v1088 = vrot.slane %v909, 3
      %v1089 = vsel %vm732, %v1087, %v1088
      %v1090 = vrot.slane %v910, 3
      %v1091 = vsel %vm732, %v1088, %v1090
      %v1092 = vrot.slane %v911, 3
      %v1093 = vsel %vm732, %v1090, %v1092
      %v1094 = vrot.slane %v912, 3
      %v1095 = vsel %vm732, %v1092, %v1094
      %v1096 = vsel %vm936, %v1089, 0
      %v1098 = vsel %vm936, %v1091, 0
      %v1100 = vsel %vm936, %v1093, 0
      %v1102 = vsel %vm936, %v1095, 0
      %v1104 = vsel %vm936, %v1094, 0
      %1106 = vmatpush.msra.mxu0 0.0
      %1107 = vmatpush.msra.mxu0 0.0
      %1108 = vmatpush.msra.mxu0 0.0
      %1109 = vmatpush.msra.mxu0 0.0
      %1110 = vmatpush.msra.mxu0 0.0
      %1111 = vmatpush.msra.mxu0 0.0
      %1112 = vmatpush.msra.mxu0 0.0
      %1113 = vmatpush.msra.mxu0 0.0
      %1114 = vmatpush.msra.mxu0 0.0
      %1115 = vmatpush.msra.mxu0 0.0
      %1116 = vmatpush.msra.mxu0 0.0
      %1117 = vmatpush.msra.mxu0 0.0
      %1118 = vmatpush.msra.mxu0 %v1086
      %1119 = vmatpush.msra.mxu0 %v1085
      %1120 = vmatpush.msra.mxu0 %v1084
      %1121 = vmatpush.msra.mxu0 %v1083
      %1122 = vmatmul.f32.gmra.mxu0 %v1096
      %v1123 = vpop.f32.mrf.mxu0
      %v1124 = vadd.f32 0.0, %v1123
      %1125 = vmatmul.f32.gmra.mxu0 %v1098
      %v1126 = vpop.f32.mrf.mxu0
      %v1127 = vadd.f32 0.0, %v1126
      %1128 = vmatmul.f32.gmra.mxu0 %v1100
      %v1129 = vpop.f32.mrf.mxu0
      %v1130 = vadd.f32 0.0, %v1129
      %1131 = vmatmul.f32.gmra.mxu0 %v1102
      %v1132 = vpop.f32.mrf.mxu0
      %v1133 = vadd.f32 0.0, %v1132
      %1134 = vmatmul.f32.gmra.mxu0 %v1104
      %v1135 = vpop.f32.mrf.mxu0
      %v1136 = vadd.f32 0.0, %v1135
      %1137 = vdwg.mxu0
      %v1138 = vadd.f32 %v1077, %v1124
      %v1139 = vadd.f32 %v1078, %v1127
      %v1140 = vadd.f32 %v1079, %v1130
      %v1141 = vadd.f32 %v1080, %v1133
      %v1142 = vadd.f32 %v1081, %v1136
      %s1143 = scalar_lea.vmem %s4, 128
      %v1144 = vld [vmem:[%s1143] sm:$0xff]
      %v1145 = vld [vmem:[%s1143 + $0x8] sm:$0xff]
      %v1146 = vld [vmem:[%s1143 + $0x10] sm:$0xff]
      %v1147 = vld [vmem:[%s1143 + $0x18] sm:$0xff]
      %v1148 = vrot.slane %v908, 4
      %v1149 = vrot.slane %v909, 4
      %v1150 = vsel %vm585, %v1148, %v1149
      %v1151 = vrot.slane %v910, 4
      %v1152 = vsel %vm585, %v1149, %v1151
      %v1153 = vrot.slane %v911, 4
      %v1154 = vsel %vm585, %v1151, %v1153
      %v1155 = vrot.slane %v912, 4
      %v1156 = vsel %vm585, %v1153, %v1155
      %v1157 = vsel %vm936, %v1150, 0
      %v1159 = vsel %vm936, %v1152, 0
      %v1161 = vsel %vm936, %v1154, 0
      %v1163 = vsel %vm936, %v1156, 0
      %v1165 = vsel %vm936, %v1155, 0
      %1167 = vmatpush.msra.mxu0 0.0
      %1168 = vmatpush.msra.mxu0 0.0
      %1169 = vmatpush.msra.mxu0 0.0
      %1170 = vmatpush.msra.mxu0 0.0
      %1171 = vmatpush.msra.mxu0 0.0
      %1172 = vmatpush.msra.mxu0 0.0
      %1173 = vmatpush.msra.mxu0 0.0
      %1174 = vmatpush.msra.mxu0 0.0
      %1175 = vmatpush.msra.mxu0 0.0
      %1176 = vmatpush.msra.mxu0 0.0
      %1177 = vmatpush.msra.mxu0 0.0
      %1178 = vmatpush.msra.mxu0 0.0
      %1179 = vmatpush.msra.mxu0 %v1147
      %1180 = vmatpush.msra.mxu0 %v1146
      %1181 = vmatpush.msra.mxu0 %v1145
      %1182 = vmatpush.msra.mxu0 %v1144
      %1183 = vmatmul.f32.gmra.mxu0 %v1157
      %v1184 = vpop.f32.mrf.mxu0
      %v1185 = vadd.f32 0.0, %v1184
      %1186 = vmatmul.f32.gmra.mxu0 %v1159
      %v1187 = vpop.f32.mrf.mxu0
      %v1188 = vadd.f32 0.0, %v1187
      %1189 = vmatmul.f32.gmra.mxu0 %v1161
      %v1190 = vpop.f32.mrf.mxu0
      %v1191 = vadd.f32 0.0, %v1190
      %1192 = vmatmul.f32.gmra.mxu0 %v1163
      %v1193 = vpop.f32.mrf.mxu0
      %v1194 = vadd.f32 0.0, %v1193
      %1195 = vmatmul.f32.gmra.mxu0 %v1165
      %v1196 = vpop.f32.mrf.mxu0
      %v1197 = vadd.f32 0.0, %v1196
      %1198 = vdwg.mxu0
      %v1199 = vadd.f32 %v1138, %v1185
      %v1200 = vadd.f32 %v1139, %v1188
      %v1201 = vadd.f32 %v1140, %v1191
      %v1202 = vadd.f32 %v1141, %v1194
      %v1203 = vadd.f32 %v1142, %v1197
      %v1204 = vld [vmem:[%s5] sm:$0x1]
      %v1206 = vperm.slane %v1204, 0
      %v1208 = vadd.f32 %v1199, %v1206
      %v1209 = vadd.f32 %v1200, %v1206
      %v1210 = vadd.f32 %v1201, %v1206
      %v1211 = vadd.f32 %v1202, %v1206
      %v1212 = vadd.f32 %v1203, %v1206
      %vm1213 = vcmp.ge.f32.partialorder %v1208, 0.0
      %vm1214 = vcmp.ge.f32.partialorder %v1209, 0.0
      %vm1215 = vcmp.ge.f32.partialorder %v1210, 0.0
      %vm1216 = vcmp.ge.f32.partialorder %v1211, 0.0
      %vm1217 = vcmp.ge.f32.partialorder %v1212, 0.0
      %v1218 = vld [vmem:[%s6] sm:$0x1]
      %v1220 = vperm.slane %v1218, 0
      %v1222 = vmul.f32 %v1220, %v1208
      %v1223 = vmul.f32 %v1220, %v1209
      %v1224 = vmul.f32 %v1220, %v1210
      %v1225 = vmul.f32 %v1220, %v1211
      %v1226 = vmul.f32 %v1220, %v1212
      %v1227 = vsel %vm1213, %v1208, %v1222
      %v1228 = vsel %vm1214, %v1209, %v1223
      %v1229 = vsel %vm1215, %v1210, %v1224
      %v1230 = vsel %vm1216, %v1211, %v1225
      %v1231 = vsel %vm1217, %v1212, %v1226
      %s1232 = ssub.s32 20, %s545
      %v1233 = vstv %s1232
      %vm1234 = vcmp.lt.s32.totalorder %v886, %v1233
      %vm1235 = vcmp.lt.s32.totalorder %v887, %v1233
      %vm1236 = vcmp.lt.s32.totalorder %v888, %v1233
      %vm1237 = vcmp.lt.s32.totalorder %v889, %v1233
      %vm1238 = vcmp.lt.s32.totalorder %v890, %v1233
      %v1239 = vsel %vm1234, 1, 0
      %v1240 = vsel %vm1235, 1, 0
      %v1241 = vsel %vm1236, 1, 0
      %v1242 = vsel %vm1237, 1, 0
      %v1243 = vsel %vm1238, 1, 0
      %vm1244 = vcmp.eq.s32.totalorder %v1239, 1
      %vm1245 = vcmp.eq.s32.totalorder %v1240, 1
      %vm1246 = vcmp.eq.s32.totalorder %v1241, 1
      %vm1247 = vcmp.eq.s32.totalorder %v1242, 1
      %vm1248 = vcmp.eq.s32.totalorder %v1243, 1
      %v1249 = vsel %vm1244, 0.0, %v1227
      %v1250 = vsel %vm1245, 0.0, %v1228
      %v1251 = vsel %vm1246, 0.0, %v1229
      %v1252 = vsel %vm1247, 0.0, %v1230
      %v1253 = vsel %vm1248, 0.0, %v1231
      %v1254 = vld [vmem:[%s7] sm:$0xff]
      %v1255 = vld [vmem:[%s7 + $0x8] sm:$0xff]
      %v1256 = vld [vmem:[%s7 + $0x10] sm:$0xff]
      %v1257 = vld [vmem:[%s7 + $0x18] sm:$0xff]
      %s1258 = scalar_lea.vmem %s7, 32
      %v1259 = vld [vmem:[%s1258] sm:$0xff]
      %v1260 = vld [vmem:[%s1258 + $0x8] sm:$0xff]
      %v1261 = vld [vmem:[%s1258 + $0x10] sm:$0xff]
      %v1262 = vld [vmem:[%s1258 + $0x18] sm:$0xff]
      %v1268 = vrot.slane %v1249, 1
      %v1269 = vrot.slane %v1250, 1
      %v1270 = vsel %vm562, %v1268, %v1269
      %v1271 = vrot.slane %v1251, 1
      %v1272 = vsel %vm562, %v1269, %v1271
      %v1273 = vrot.slane %v1252, 1
      %v1274 = vsel %vm562, %v1271, %v1273
      %v1275 = vrot.slane %v1253, 1
      %v1276 = vsel %vm562, %v1273, %v1275
      %v1277 = vsel %vm936, %v1270, 0
      %v1279 = vsel %vm936, %v1272, 0
      %v1281 = vsel %vm936, %v1274, 0
      %v1283 = vsel %vm936, %v1276, 0
      %1285 = vmatpush.msra.mxu0 0.0
      %1286 = vmatpush.msra.mxu0 0.0
      %1287 = vmatpush.msra.mxu0 0.0
      %1288 = vmatpush.msra.mxu0 0.0
      %1289 = vmatpush.msra.mxu0 0.0
      %1290 = vmatpush.msra.mxu0 0.0
      %1291 = vmatpush.msra.mxu0 0.0
      %1292 = vmatpush.msra.mxu0 0.0
      %1293 = vmatpush.msra.mxu0 0.0
      %1294 = vmatpush.msra.mxu0 0.0
      %1295 = vmatpush.msra.mxu0 0.0
      %1296 = vmatpush.msra.mxu0 0.0
      %1297 = vmatpush.msra.mxu0 %v1262
      %1298 = vmatpush.msra.mxu0 %v1261
      %1299 = vmatpush.msra.mxu0 %v1260
      %1300 = vmatpush.msra.mxu0 %v1259
      %1301 = vmatmul.f32.gmra.mxu0 %v1277
      %v1302 = vpop.f32.mrf.mxu0
      %v1303 = vadd.f32 0.0, %v1302
      %1304 = vmatmul.f32.gmra.mxu0 %v1279
      %v1305 = vpop.f32.mrf.mxu0
      %v1306 = vadd.f32 0.0, %v1305
      %1307 = vmatmul.f32.gmra.mxu0 %v1281
      %v1308 = vpop.f32.mrf.mxu0
      %v1309 = vadd.f32 0.0, %v1308
      %1310 = vmatmul.f32.gmra.mxu0 %v1283
      %v1311 = vpop.f32.mrf.mxu0
      %v1312 = vadd.f32 0.0, %v1311
      %1313 = vdwg.mxu0
      %v1314 = vsel %vm936, %v1249, 0
      %v1316 = vsel %vm936, %v1250, 0
      %v1318 = vsel %vm936, %v1251, 0
      %v1320 = vsel %vm936, %v1252, 0
      %1322 = vmatpush.msra.mxu0 0.0
      %1323 = vmatpush.msra.mxu0 0.0
      %1324 = vmatpush.msra.mxu0 0.0
      %1325 = vmatpush.msra.mxu0 0.0
      %1326 = vmatpush.msra.mxu0 0.0
      %1327 = vmatpush.msra.mxu0 0.0
      %1328 = vmatpush.msra.mxu0 0.0
      %1329 = vmatpush.msra.mxu0 0.0
      %1330 = vmatpush.msra.mxu0 0.0
      %1331 = vmatpush.msra.mxu0 0.0
      %1332 = vmatpush.msra.mxu0 0.0
      %1333 = vmatpush.msra.mxu0 0.0
      %1334 = vmatpush.msra.mxu0 %v1257
      %1335 = vmatpush.msra.mxu0 %v1256
      %1336 = vmatpush.msra.mxu0 %v1255
      %1337 = vmatpush.msra.mxu0 %v1254
      %1338 = vmatmul.f32.gmra.mxu0 %v1314
      %v1339 = vpop.f32.mrf.mxu0
      %v1340 = vadd.f32 %v1303, %v1339
      %1341 = vmatmul.f32.gmra.mxu0 %v1316
      %v1342 = vpop.f32.mrf.mxu0
      %v1343 = vadd.f32 %v1306, %v1342
      %1344 = vmatmul.f32.gmra.mxu0 %v1318
      %v1345 = vpop.f32.mrf.mxu0
      %v1346 = vadd.f32 %v1309, %v1345
      %1347 = vmatmul.f32.gmra.mxu0 %v1320
      %v1348 = vpop.f32.mrf.mxu0
      %v1349 = vadd.f32 %v1312, %v1348
      %1350 = vdwg.mxu0
      %s1351 = scalar_lea.vmem %s7, 64
      %v1352 = vld [vmem:[%s1351] sm:$0xff]
      %v1353 = vld [vmem:[%s1351 + $0x8] sm:$0xff]
      %v1354 = vld [vmem:[%s1351 + $0x10] sm:$0xff]
      %v1355 = vld [vmem:[%s1351 + $0x18] sm:$0xff]
      %v1356 = vrot.slane %v1249, 2
      %v1357 = vrot.slane %v1250, 2
      %v1358 = vsel %vm668, %v1356, %v1357
      %v1359 = vrot.slane %v1251, 2
      %v1360 = vsel %vm668, %v1357, %v1359
      %v1361 = vrot.slane %v1252, 2
      %v1362 = vsel %vm668, %v1359, %v1361
      %v1363 = vrot.slane %v1253, 2
      %v1364 = vsel %vm668, %v1361, %v1363
      %v1365 = vsel %vm936, %v1358, 0
      %v1367 = vsel %vm936, %v1360, 0
      %v1369 = vsel %vm936, %v1362, 0
      %v1371 = vsel %vm936, %v1364, 0
      %1373 = vmatpush.msra.mxu0 0.0
      %1374 = vmatpush.msra.mxu0 0.0
      %1375 = vmatpush.msra.mxu0 0.0
      %1376 = vmatpush.msra.mxu0 0.0
      %1377 = vmatpush.msra.mxu0 0.0
      %1378 = vmatpush.msra.mxu0 0.0
      %1379 = vmatpush.msra.mxu0 0.0
      %1380 = vmatpush.msra.mxu0 0.0
      %1381 = vmatpush.msra.mxu0 0.0
      %1382 = vmatpush.msra.mxu0 0.0
      %1383 = vmatpush.msra.mxu0 0.0
      %1384 = vmatpush.msra.mxu0 0.0
      %1385 = vmatpush.msra.mxu0 %v1355
      %1386 = vmatpush.msra.mxu0 %v1354
      %1387 = vmatpush.msra.mxu0 %v1353
      %1388 = vmatpush.msra.mxu0 %v1352
      %1389 = vmatmul.f32.gmra.mxu0 %v1365
      %v1390 = vpop.f32.mrf.mxu0
      %v1391 = vadd.f32 0.0, %v1390
      %1392 = vmatmul.f32.gmra.mxu0 %v1367
      %v1393 = vpop.f32.mrf.mxu0
      %v1394 = vadd.f32 0.0, %v1393
      %1395 = vmatmul.f32.gmra.mxu0 %v1369
      %v1396 = vpop.f32.mrf.mxu0
      %v1397 = vadd.f32 0.0, %v1396
      %1398 = vmatmul.f32.gmra.mxu0 %v1371
      %v1399 = vpop.f32.mrf.mxu0
      %v1400 = vadd.f32 0.0, %v1399
      %1401 = vdwg.mxu0
      %v1402 = vadd.f32 %v1340, %v1391
      %v1403 = vadd.f32 %v1343, %v1394
      %v1404 = vadd.f32 %v1346, %v1397
      %v1405 = vadd.f32 %v1349, %v1400
      %s1406 = scalar_lea.vmem %s7, 96
      %v1407 = vld [vmem:[%s1406] sm:$0xff]
      %v1408 = vld [vmem:[%s1406 + $0x8] sm:$0xff]
      %v1409 = vld [vmem:[%s1406 + $0x10] sm:$0xff]
      %v1410 = vld [vmem:[%s1406 + $0x18] sm:$0xff]
      %v1411 = vrot.slane %v1249, 3
      %v1412 = vrot.slane %v1250, 3
      %v1413 = vsel %vm732, %v1411, %v1412
      %v1414 = vrot.slane %v1251, 3
      %v1415 = vsel %vm732, %v1412, %v1414
      %v1416 = vrot.slane %v1252, 3
      %v1417 = vsel %vm732, %v1414, %v1416
      %v1418 = vrot.slane %v1253, 3
      %v1419 = vsel %vm732, %v1416, %v1418
      %v1420 = vsel %vm936, %v1413, 0
      %v1422 = vsel %vm936, %v1415, 0
      %v1424 = vsel %vm936, %v1417, 0
      %v1426 = vsel %vm936, %v1419, 0
      %1428 = vmatpush.msra.mxu0 0.0
      %1429 = vmatpush.msra.mxu0 0.0
      %1430 = vmatpush.msra.mxu0 0.0
      %1431 = vmatpush.msra.mxu0 0.0
      %1432 = vmatpush.msra.mxu0 0.0
      %1433 = vmatpush.msra.mxu0 0.0
      %1434 = vmatpush.msra.mxu0 0.0
      %1435 = vmatpush.msra.mxu0 0.0
      %1436 = vmatpush.msra.mxu0 0.0
      %1437 = vmatpush.msra.mxu0 0.0
      %1438 = vmatpush.msra.mxu0 0.0
      %1439 = vmatpush.msra.mxu0 0.0
      %1440 = vmatpush.msra.mxu0 %v1410
      %1441 = vmatpush.msra.mxu0 %v1409
      %1442 = vmatpush.msra.mxu0 %v1408
      %1443 = vmatpush.msra.mxu0 %v1407
      %1444 = vmatmul.f32.gmra.mxu0 %v1420
      %v1445 = vpop.f32.mrf.mxu0
      %v1446 = vadd.f32 0.0, %v1445
      %1447 = vmatmul.f32.gmra.mxu0 %v1422
      %v1448 = vpop.f32.mrf.mxu0
      %v1449 = vadd.f32 0.0, %v1448
      %1450 = vmatmul.f32.gmra.mxu0 %v1424
      %v1451 = vpop.f32.mrf.mxu0
      %v1452 = vadd.f32 0.0, %v1451
      %1453 = vmatmul.f32.gmra.mxu0 %v1426
      %v1454 = vpop.f32.mrf.mxu0
      %v1455 = vadd.f32 0.0, %v1454
      %1456 = vdwg.mxu0
      %v1457 = vadd.f32 %v1402, %v1446
      %v1458 = vadd.f32 %v1403, %v1449
      %v1459 = vadd.f32 %v1404, %v1452
      %v1460 = vadd.f32 %v1405, %v1455
      %s1461 = scalar_lea.vmem %s7, 128
      %v1462 = vld [vmem:[%s1461] sm:$0xff]
      %v1463 = vld [vmem:[%s1461 + $0x8] sm:$0xff]
      %v1464 = vld [vmem:[%s1461 + $0x10] sm:$0xff]
      %v1465 = vld [vmem:[%s1461 + $0x18] sm:$0xff]
      %v1466 = vrot.slane %v1249, 4
      %v1467 = vrot.slane %v1250, 4
      %v1468 = vsel %vm585, %v1466, %v1467
      %v1469 = vrot.slane %v1251, 4
      %v1470 = vsel %vm585, %v1467, %v1469
      %v1471 = vrot.slane %v1252, 4
      %v1472 = vsel %vm585, %v1469, %v1471
      %v1473 = vrot.slane %v1253, 4
      %v1474 = vsel %vm585, %v1471, %v1473
      %v1475 = vsel %vm936, %v1468, 0
      %v1477 = vsel %vm936, %v1470, 0
      %v1479 = vsel %vm936, %v1472, 0
      %v1481 = vsel %vm936, %v1474, 0
      %1483 = vmatpush.msra.mxu0 0.0
      %1484 = vmatpush.msra.mxu0 0.0
      %1485 = vmatpush.msra.mxu0 0.0
      %1486 = vmatpush.msra.mxu0 0.0
      %1487 = vmatpush.msra.mxu0 0.0
      %1488 = vmatpush.msra.mxu0 0.0
      %1489 = vmatpush.msra.mxu0 0.0
      %1490 = vmatpush.msra.mxu0 0.0
      %1491 = vmatpush.msra.mxu0 0.0
      %1492 = vmatpush.msra.mxu0 0.0
      %1493 = vmatpush.msra.mxu0 0.0
      %1494 = vmatpush.msra.mxu0 0.0
      %1495 = vmatpush.msra.mxu0 %v1465
      %1496 = vmatpush.msra.mxu0 %v1464
      %1497 = vmatpush.msra.mxu0 %v1463
      %1498 = vmatpush.msra.mxu0 %v1462
      %1499 = vmatmul.f32.gmra.mxu0 %v1475
      %v1500 = vpop.f32.mrf.mxu0
      %v1501 = vadd.f32 0.0, %v1500
      %1502 = vmatmul.f32.gmra.mxu0 %v1477
      %v1503 = vpop.f32.mrf.mxu0
      %v1504 = vadd.f32 0.0, %v1503
      %1505 = vmatmul.f32.gmra.mxu0 %v1479
      %v1506 = vpop.f32.mrf.mxu0
      %v1507 = vadd.f32 0.0, %v1506
      %1508 = vmatmul.f32.gmra.mxu0 %v1481
      %v1509 = vpop.f32.mrf.mxu0
      %v1510 = vadd.f32 0.0, %v1509
      %1511 = vdwg.mxu0
      %v1512 = vadd.f32 %v1457, %v1501
      %v1513 = vadd.f32 %v1458, %v1504
      %v1514 = vadd.f32 %v1459, %v1507
      %v1515 = vadd.f32 %v1460, %v1510
      %v1516 = vld [vmem:[%s8] sm:$0x1]
      %v1518 = vperm.slane %v1516, 0
      %v1520 = vadd.f32 %v1512, %v1518
      %v1521 = vadd.f32 %v1513, %v1518
      %v1522 = vadd.f32 %v1514, %v1518
      %v1523 = vadd.f32 %v1515, %v1518
      %vm1524 = vcmp.ge.f32.partialorder %v1520, 0.0
      %vm1525 = vcmp.ge.f32.partialorder %v1521, 0.0
      %vm1526 = vcmp.ge.f32.partialorder %v1522, 0.0
      %vm1527 = vcmp.ge.f32.partialorder %v1523, 0.0
      %v1528 = vld [vmem:[%s9] sm:$0x1]
      %v1530 = vperm.slane %v1528, 0
      %v1532 = vmul.f32 %v1530, %v1520
      %v1533 = vmul.f32 %v1530, %v1521
      %v1534 = vmul.f32 %v1530, %v1522
      %v1535 = vmul.f32 %v1530, %v1523
      %v1536 = vsel %vm1524, %v1520, %v1532
      %v1537 = vsel %vm1525, %v1521, %v1533
      %v1538 = vsel %vm1526, %v1522, %v1534
      %v1539 = vsel %vm1527, %v1523, %v1535
      %s1540 = ssub.s32 16, %s545
      %v1541 = vstv %s1540
      %vm1542 = vcmp.lt.s32.totalorder %v886, %v1541
      %vm1543 = vcmp.lt.s32.totalorder %v887, %v1541
      %vm1544 = vcmp.lt.s32.totalorder %v888, %v1541
      %vm1545 = vcmp.lt.s32.totalorder %v889, %v1541
      %v1546 = vsel %vm1542, 1, 0
      %v1547 = vsel %vm1543, 1, 0
      %v1548 = vsel %vm1544, 1, 0
      %v1549 = vsel %vm1545, 1, 0
      %vm1550 = vcmp.eq.s32.totalorder %v1546, 1
      %vm1551 = vcmp.eq.s32.totalorder %v1547, 1
      %vm1552 = vcmp.eq.s32.totalorder %v1548, 1
      %vm1553 = vcmp.eq.s32.totalorder %v1549, 1
      %v1554 = vsel %vm1550, 0.0, %v1536
      %v1555 = vsel %vm1551, 0.0, %v1537
      %v1556 = vsel %vm1552, 0.0, %v1538
      %v1557 = vsel %vm1553, 0.0, %v1539
      %v1558 = vld [vmem:[%s10] sm:$0xff]
      %v1559 = vld [vmem:[%s10 + $0x8] sm:$0xff]
      %v1560 = vld [vmem:[%s10 + $0x10] sm:$0xff]
      %v1561 = vld [vmem:[%s10 + $0x18] sm:$0xff]
      %s1562 = scalar_lea.vmem %s10, 32
      %v1563 = vld [vmem:[%s1562] sm:$0xff]
      %v1564 = vld [vmem:[%s1562 + $0x8] sm:$0xff]
      %v1565 = vld [vmem:[%s1562 + $0x10] sm:$0xff]
      %v1566 = vld [vmem:[%s1562 + $0x18] sm:$0xff]
      %v1571 = vrot.slane %v1554, 2
      %v1572 = vrot.slane %v1555, 2
      %v1573 = vsel %vm668, %v1571, %v1572
      %v1574 = vrot.slane %v1556, 2
      %v1575 = vsel %vm668, %v1572, %v1574
      %v1576 = vrot.slane %v1557, 2
      %v1577 = vsel %vm668, %v1574, %v1576
      %v1578 = vsel %vm936, %v1573, 0
      %v1580 = vsel %vm936, %v1575, 0
      %v1582 = vsel %vm936, %v1577, 0
      %1584 = vmatpush.msra.mxu0 0.0
      %1585 = vmatpush.msra.mxu0 0.0
      %1586 = vmatpush.msra.mxu0 0.0
      %1587 = vmatpush.msra.mxu0 0.0
      %1588 = vmatpush.msra.mxu0 0.0
      %1589 = vmatpush.msra.mxu0 0.0
      %1590 = vmatpush.msra.mxu0 0.0
      %1591 = vmatpush.msra.mxu0 0.0
      %1592 = vmatpush.msra.mxu0 0.0
      %1593 = vmatpush.msra.mxu0 0.0
      %1594 = vmatpush.msra.mxu0 0.0
      %1595 = vmatpush.msra.mxu0 0.0
      %1596 = vmatpush.msra.mxu0 %v1566
      %1597 = vmatpush.msra.mxu0 %v1565
      %1598 = vmatpush.msra.mxu0 %v1564
      %1599 = vmatpush.msra.mxu0 %v1563
      %1600 = vmatmul.f32.gmra.mxu0 %v1578
      %v1601 = vpop.f32.mrf.mxu0
      %v1602 = vadd.f32 0.0, %v1601
      %1603 = vmatmul.f32.gmra.mxu0 %v1580
      %v1604 = vpop.f32.mrf.mxu0
      %v1605 = vadd.f32 0.0, %v1604
      %1606 = vmatmul.f32.gmra.mxu0 %v1582
      %v1607 = vpop.f32.mrf.mxu0
      %v1608 = vadd.f32 0.0, %v1607
      %1609 = vdwg.mxu0
      %v1610 = vsel %vm936, %v1554, 0
      %v1612 = vsel %vm936, %v1555, 0
      %v1614 = vsel %vm936, %v1556, 0
      %1616 = vmatpush.msra.mxu0 0.0
      %1617 = vmatpush.msra.mxu0 0.0
      %1618 = vmatpush.msra.mxu0 0.0
      %1619 = vmatpush.msra.mxu0 0.0
      %1620 = vmatpush.msra.mxu0 0.0
      %1621 = vmatpush.msra.mxu0 0.0
      %1622 = vmatpush.msra.mxu0 0.0
      %1623 = vmatpush.msra.mxu0 0.0
      %1624 = vmatpush.msra.mxu0 0.0
      %1625 = vmatpush.msra.mxu0 0.0
      %1626 = vmatpush.msra.mxu0 0.0
      %1627 = vmatpush.msra.mxu0 0.0
      %1628 = vmatpush.msra.mxu0 %v1561
      %1629 = vmatpush.msra.mxu0 %v1560
      %1630 = vmatpush.msra.mxu0 %v1559
      %1631 = vmatpush.msra.mxu0 %v1558
      %1632 = vmatmul.f32.gmra.mxu0 %v1610
      %v1633 = vpop.f32.mrf.mxu0
      %v1634 = vadd.f32 %v1602, %v1633
      %1635 = vmatmul.f32.gmra.mxu0 %v1612
      %v1636 = vpop.f32.mrf.mxu0
      %v1637 = vadd.f32 %v1605, %v1636
      %1638 = vmatmul.f32.gmra.mxu0 %v1614
      %v1639 = vpop.f32.mrf.mxu0
      %v1640 = vadd.f32 %v1608, %v1639
      %1641 = vdwg.mxu0
      %s1642 = scalar_lea.vmem %s10, 64
      %v1643 = vld [vmem:[%s1642] sm:$0xff]
      %v1644 = vld [vmem:[%s1642 + $0x8] sm:$0xff]
      %v1645 = vld [vmem:[%s1642 + $0x10] sm:$0xff]
      %v1646 = vld [vmem:[%s1642 + $0x18] sm:$0xff]
      %v1647 = vrot.slane %v1554, 4
      %v1648 = vrot.slane %v1555, 4
      %v1649 = vsel %vm585, %v1647, %v1648
      %v1650 = vrot.slane %v1556, 4
      %v1651 = vsel %vm585, %v1648, %v1650
      %v1652 = vrot.slane %v1557, 4
      %v1653 = vsel %vm585, %v1650, %v1652
      %v1654 = vsel %vm936, %v1649, 0
      %v1656 = vsel %vm936, %v1651, 0
      %v1658 = vsel %vm936, %v1653, 0
      %1660 = vmatpush.msra.mxu0 0.0
      %1661 = vmatpush.msra.mxu0 0.0
      %1662 = vmatpush.msra.mxu0 0.0
      %1663 = vmatpush.msra.mxu0 0.0
      %1664 = vmatpush.msra.mxu0 0.0
      %1665 = vmatpush.msra.mxu0 0.0
      %1666 = vmatpush.msra.mxu0 0.0
      %1667 = vmatpush.msra.mxu0 0.0
      %1668 = vmatpush.msra.mxu0 0.0
      %1669 = vmatpush.msra.mxu0 0.0
      %1670 = vmatpush.msra.mxu0 0.0
      %1671 = vmatpush.msra.mxu0 0.0
      %1672 = vmatpush.msra.mxu0 %v1646
      %1673 = vmatpush.msra.mxu0 %v1645
      %1674 = vmatpush.msra.mxu0 %v1644
      %1675 = vmatpush.msra.mxu0 %v1643
      %1676 = vmatmul.f32.gmra.mxu0 %v1654
      %v1677 = vpop.f32.mrf.mxu0
      %v1678 = vadd.f32 0.0, %v1677
      %1679 = vmatmul.f32.gmra.mxu0 %v1656
      %v1680 = vpop.f32.mrf.mxu0
      %v1681 = vadd.f32 0.0, %v1680
      %1682 = vmatmul.f32.gmra.mxu0 %v1658
      %v1683 = vpop.f32.mrf.mxu0
      %v1684 = vadd.f32 0.0, %v1683
      %1685 = vdwg.mxu0
      %v1686 = vadd.f32 %v1634, %v1678
      %v1687 = vadd.f32 %v1637, %v1681
      %v1688 = vadd.f32 %v1640, %v1684
      %s1689 = scalar_lea.vmem %s10, 96
      %v1690 = vld [vmem:[%s1689] sm:$0xff]
      %v1691 = vld [vmem:[%s1689 + $0x8] sm:$0xff]
      %v1692 = vld [vmem:[%s1689 + $0x10] sm:$0xff]
      %v1693 = vld [vmem:[%s1689 + $0x18] sm:$0xff]
      %vm1694 = vcmask 1041408
      %v1695 = vrot.slane %v1554, 6
      %v1696 = vrot.slane %v1555, 6
      %v1697 = vsel %vm1694, %v1695, %v1696
      %v1698 = vrot.slane %v1556, 6
      %v1699 = vsel %vm1694, %v1696, %v1698
      %v1700 = vrot.slane %v1557, 6
      %v1701 = vsel %vm1694, %v1698, %v1700
      %v1702 = vsel %vm936, %v1697, 0
      %v1704 = vsel %vm936, %v1699, 0
      %v1706 = vsel %vm936, %v1701, 0
      %1708 = vmatpush.msra.mxu0 0.0
      %1709 = vmatpush.msra.mxu0 0.0
      %1710 = vmatpush.msra.mxu0 0.0
      %1711 = vmatpush.msra.mxu0 0.0
      %1712 = vmatpush.msra.mxu0 0.0
      %1713 = vmatpush.msra.mxu0 0.0
      %1714 = vmatpush.msra.mxu0 0.0
      %1715 = vmatpush.msra.mxu0 0.0
      %1716 = vmatpush.msra.mxu0 0.0
      %1717 = vmatpush.msra.mxu0 0.0
      %1718 = vmatpush.msra.mxu0 0.0
      %1719 = vmatpush.msra.mxu0 0.0
      %1720 = vmatpush.msra.mxu0 %v1693
      %1721 = vmatpush.msra.mxu0 %v1692
      %1722 = vmatpush.msra.mxu0 %v1691
      %1723 = vmatpush.msra.mxu0 %v1690
      %1724 = vmatmul.f32.gmra.mxu0 %v1702
      %v1725 = vpop.f32.mrf.mxu0
      %v1726 = vadd.f32 0.0, %v1725
      %1727 = vmatmul.f32.gmra.mxu0 %v1704
      %v1728 = vpop.f32.mrf.mxu0
      %v1729 = vadd.f32 0.0, %v1728
      %1730 = vmatmul.f32.gmra.mxu0 %v1706
      %v1731 = vpop.f32.mrf.mxu0
      %v1732 = vadd.f32 0.0, %v1731
      %1733 = vdwg.mxu0
      %v1734 = vadd.f32 %v1686, %v1726
      %v1735 = vadd.f32 %v1687, %v1729
      %v1736 = vadd.f32 %v1688, %v1732
      %s1737 = scalar_lea.vmem %s10, 128
      %v1738 = vld [vmem:[%s1737] sm:$0xff]
      %v1739 = vld [vmem:[%s1737 + $0x8] sm:$0xff]
      %v1740 = vld [vmem:[%s1737 + $0x10] sm:$0xff]
      %v1741 = vld [vmem:[%s1737 + $0x18] sm:$0xff]
      %v1742 = vsel %vm936, %v1557, 0
      %1744 = vmatpush.msra.mxu0 0.0
      %1745 = vmatpush.msra.mxu0 0.0
      %1746 = vmatpush.msra.mxu0 0.0
      %1747 = vmatpush.msra.mxu0 0.0
      %1748 = vmatpush.msra.mxu0 0.0
      %1749 = vmatpush.msra.mxu0 0.0
      %1750 = vmatpush.msra.mxu0 0.0
      %1751 = vmatpush.msra.mxu0 0.0
      %1752 = vmatpush.msra.mxu0 0.0
      %1753 = vmatpush.msra.mxu0 0.0
      %1754 = vmatpush.msra.mxu0 0.0
      %1755 = vmatpush.msra.mxu0 0.0
      %1756 = vmatpush.msra.mxu0 %v1741
      %1757 = vmatpush.msra.mxu0 %v1740
      %1758 = vmatpush.msra.mxu0 %v1739
      %1759 = vmatpush.msra.mxu0 %v1738
      %1760 = vmatmul.f32.gmra.mxu0 %v1612
      %v1761 = vpop.f32.mrf.mxu0
      %v1762 = vadd.f32 0.0, %v1761
      %1763 = vmatmul.f32.gmra.mxu0 %v1614
      %v1764 = vpop.f32.mrf.mxu0
      %v1765 = vadd.f32 0.0, %v1764
      %1766 = vmatmul.f32.gmra.mxu0 %v1742
      %v1767 = vpop.f32.mrf.mxu0
      %v1768 = vadd.f32 0.0, %v1767
      %1769 = vdwg.mxu0
      %v1770 = vadd.f32 %v1734, %v1762
      %v1771 = vadd.f32 %v1735, %v1765
      %v1772 = vadd.f32 %v1736, %v1768
      %v1773 = vld [vmem:[%s11] sm:$0x1]
      %v1775 = vperm.slane %v1773, 0
      %v1777 = vadd.f32 %v1770, %v1775
      %v1778 = vadd.f32 %v1771, %v1775
      %v1779 = vadd.f32 %v1772, %v1775
      %vm1780 = vcmp.ge.f32.partialorder %v1777, 0.0
      %vm1781 = vcmp.ge.f32.partialorder %v1778, 0.0
      %vm1782 = vcmp.ge.f32.partialorder %v1779, 0.0
      %v1783 = vld [vmem:[%s12] sm:$0x1]
      %v1785 = vperm.slane %v1783, 0
      %v1787 = vmul.f32 %v1785, %v1777
      %v1788 = vmul.f32 %v1785, %v1778
      %v1789 = vmul.f32 %v1785, %v1779
      %v1790 = vsel %vm1780, %v1777, %v1787
      %v1791 = vsel %vm1781, %v1778, %v1788
      %v1792 = vsel %vm1782, %v1779, %v1789
      %s1793 = ssub.s32 8, %s545
      %v1794 = vstv %s1793
      %vm1795 = vcmp.lt.s32.totalorder %v886, %v1794
      %vm1796 = vcmp.lt.s32.totalorder %v887, %v1794
      %vm1797 = vcmp.lt.s32.totalorder %v888, %v1794
      %v1798 = vsel %vm1795, 1, 0
      %v1799 = vsel %vm1796, 1, 0
      %v1800 = vsel %vm1797, 1, 0
      %vm1801 = vcmp.eq.s32.totalorder %v1798, 1
      %vm1802 = vcmp.eq.s32.totalorder %v1799, 1
      %vm1803 = vcmp.eq.s32.totalorder %v1800, 1
      %v1804 = vsel %vm1801, 0.0, %v1790
      %v1805 = vsel %vm1802, 0.0, %v1791
      %v1806 = vsel %vm1803, 0.0, %v1792
      %v1807 = vld [vmem:[%s13] sm:$0xff]
      %v1808 = vld [vmem:[%s13 + $0x8] sm:$0xff]
      %s1809 = scalar_lea.vmem %s13, 16
      %v1810 = vld [vmem:[%s1809] sm:$0xff]
      %v1811 = vld [vmem:[%s1809 + $0x8] sm:$0xff]
      %v1815 = vrot.slane %v1804, 2
      %v1816 = vrot.slane %v1805, 2
      %v1817 = vsel %vm668, %v1815, %v1816
      %v1818 = vrot.slane %v1806, 2
      %v1819 = vsel %vm668, %v1816, %v1818
      %vm1820 = vcmask 130048
      %v1821 = vsel %vm1820, %v1817, 0
      %v1823 = vsel %vm1820, %v1819, 0
      %1825 = vmatpush.msra.mxu0 0.0
      %1826 = vmatpush.msra.mxu0 0.0
      %1827 = vmatpush.msra.mxu0 0.0
      %1828 = vmatpush.msra.mxu0 0.0
      %1829 = vmatpush.msra.mxu0 0.0
      %1830 = vmatpush.msra.mxu0 0.0
      %1831 = vmatpush.msra.mxu0 0.0
      %1832 = vmatpush.msra.mxu0 0.0
      %1833 = vmatpush.msra.mxu0 0.0
      %1834 = vmatpush.msra.mxu0 0.0
      %1835 = vmatpush.msra.mxu0 0.0
      %1836 = vmatpush.msra.mxu0 0.0
      %1837 = vmatpush.msra.mxu0 0.0
      %1838 = vmatpush.msra.mxu0 0.0
      %1839 = vmatpush.msra.mxu0 %v1811
      %1840 = vmatpush.msra.mxu0 %v1810
      %1841 = vmatmul.f32.gmra.mxu0 %v1821
      %v1842 = vpop.f32.mrf.mxu0
      %v1843 = vadd.f32 0.0, %v1842
      %1844 = vmatmul.f32.gmra.mxu0 %v1823
      %v1845 = vpop.f32.mrf.mxu0
      %v1846 = vadd.f32 0.0, %v1845
      %1847 = vdwg.mxu0
      %v1848 = vsel %vm1820, %v1804, 0
      %v1850 = vsel %vm1820, %v1805, 0
      %1852 = vmatpush.msra.mxu0 0.0
      %1853 = vmatpush.msra.mxu0 0.0
      %1854 = vmatpush.msra.mxu0 0.0
      %1855 = vmatpush.msra.mxu0 0.0
      %1856 = vmatpush.msra.mxu0 0.0
      %1857 = vmatpush.msra.mxu0 0.0
      %1858 = vmatpush.msra.mxu0 0.0
      %1859 = vmatpush.msra.mxu0 0.0
      %1860 = vmatpush.msra.mxu0 0.0
      %1861 = vmatpush.msra.mxu0 0.0
      %1862 = vmatpush.msra.mxu0 0.0
      %1863 = vmatpush.msra.mxu0 0.0
      %1864 = vmatpush.msra.mxu0 0.0
      %1865 = vmatpush.msra.mxu0 0.0
      %1866 = vmatpush.msra.mxu0 %v1808
      %1867 = vmatpush.msra.mxu0 %v1807
      %1868 = vmatmul.f32.gmra.mxu0 %v1848
      %v1869 = vpop.f32.mrf.mxu0
      %v1870 = vadd.f32 %v1843, %v1869
      %1871 = vmatmul.f32.gmra.mxu0 %v1850
      %v1872 = vpop.f32.mrf.mxu0
      %v1873 = vadd.f32 %v1846, %v1872
      %1874 = vdwg.mxu0
      %s1875 = scalar_lea.vmem %s13, 32
      %v1876 = vld [vmem:[%s1875] sm:$0xff]
      %v1877 = vld [vmem:[%s1875 + $0x8] sm:$0xff]
      %v1878 = vrot.slane %v1804, 4
      %v1879 = vrot.slane %v1805, 4
      %v1880 = vsel %vm585, %v1878, %v1879
      %v1881 = vrot.slane %v1806, 4
      %v1882 = vsel %vm585, %v1879, %v1881
      %v1883 = vsel %vm1820, %v1880, 0
      %v1885 = vsel %vm1820, %v1882, 0
      %1887 = vmatpush.msra.mxu0 0.0
      %1888 = vmatpush.msra.mxu0 0.0
      %1889 = vmatpush.msra.mxu0 0.0
      %1890 = vmatpush.msra.mxu0 0.0
      %1891 = vmatpush.msra.mxu0 0.0
      %1892 = vmatpush.msra.mxu0 0.0
      %1893 = vmatpush.msra.mxu0 0.0
      %1894 = vmatpush.msra.mxu0 0.0
      %1895 = vmatpush.msra.mxu0 0.0
      %1896 = vmatpush.msra.mxu0 0.0
      %1897 = vmatpush.msra.mxu0 0.0
      %1898 = vmatpush.msra.mxu0 0.0
      %1899 = vmatpush.msra.mxu0 0.0
      %1900 = vmatpush.msra.mxu0 0.0
      %1901 = vmatpush.msra.mxu0 %v1877
      %1902 = vmatpush.msra.mxu0 %v1876
      %1903 = vmatmul.f32.gmra.mxu0 %v1883
      %v1904 = vpop.f32.mrf.mxu0
      %v1905 = vadd.f32 0.0, %v1904
      %1906 = vmatmul.f32.gmra.mxu0 %v1885
      %v1907 = vpop.f32.mrf.mxu0
      %v1908 = vadd.f32 0.0, %v1907
      %1909 = vdwg.mxu0
      %v1910 = vadd.f32 %v1870, %v1905
      %v1911 = vadd.f32 %v1873, %v1908
      %s1912 = scalar_lea.vmem %s13, 48
      %v1913 = vld [vmem:[%s1912] sm:$0xff]
      %v1914 = vld [vmem:[%s1912 + $0x8] sm:$0xff]
      %v1915 = vrot.slane %v1804, 6
      %v1916 = vrot.slane %v1805, 6
      %v1917 = vsel %vm1694, %v1915, %v1916
      %v1918 = vrot.slane %v1806, 6
      %v1919 = vsel %vm1694, %v1916, %v1918
      %v1920 = vsel %vm1820, %v1917, 0
      %v1922 = vsel %vm1820, %v1919, 0
      %1924 = vmatpush.msra.mxu0 0.0
      %1925 = vmatpush.msra.mxu0 0.0
      %1926 = vmatpush.msra.mxu0 0.0
      %1927 = vmatpush.msra.mxu0 0.0
      %1928 = vmatpush.msra.mxu0 0.0
      %1929 = vmatpush.msra.mxu0 0.0
      %1930 = vmatpush.msra.mxu0 0.0
      %1931 = vmatpush.msra.mxu0 0.0
      %1932 = vmatpush.msra.mxu0 0.0
      %1933 = vmatpush.msra.mxu0 0.0
      %1934 = vmatpush.msra.mxu0 0.0
      %1935 = vmatpush.msra.mxu0 0.0
      %1936 = vmatpush.msra.mxu0 0.0
      %1937 = vmatpush.msra.mxu0 0.0
      %1938 = vmatpush.msra.mxu0 %v1914
      %1939 = vmatpush.msra.mxu0 %v1913
      %1940 = vmatmul.f32.gmra.mxu0 %v1920
      %v1941 = vpop.f32.mrf.mxu0
      %v1942 = vadd.f32 0.0, %v1941
      %1943 = vmatmul.f32.gmra.mxu0 %v1922
      %v1944 = vpop.f32.mrf.mxu0
      %v1945 = vadd.f32 0.0, %v1944
      %1946 = vdwg.mxu0
      %v1947 = vadd.f32 %v1910, %v1942
      %v1948 = vadd.f32 %v1911, %v1945
      %s1949 = scalar_lea.vmem %s13, 64
      %v1950 = vld [vmem:[%s1949] sm:$0xff]
      %v1951 = vld [vmem:[%s1949 + $0x8] sm:$0xff]
      %v1952 = vsel %vm1820, %v1806, 0
      %1954 = vmatpush.msra.mxu0 0.0
      %1955 = vmatpush.msra.mxu0 0.0
      %1956 = vmatpush.msra.mxu0 0.0
      %1957 = vmatpush.msra.mxu0 0.0
      %1958 = vmatpush.msra.mxu0 0.0
      %1959 = vmatpush.msra.mxu0 0.0
      %1960 = vmatpush.msra.mxu0 0.0
      %1961 = vmatpush.msra.mxu0 0.0
      %1962 = vmatpush.msra.mxu0 0.0
      %1963 = vmatpush.msra.mxu0 0.0
      %1964 = vmatpush.msra.mxu0 0.0
      %1965 = vmatpush.msra.mxu0 0.0
      %1966 = vmatpush.msra.mxu0 0.0
      %1967 = vmatpush.msra.mxu0 0.0
      %1968 = vmatpush.msra.mxu0 %v1951
      %1969 = vmatpush.msra.mxu0 %v1950
      %1970 = vmatmul.f32.gmra.mxu0 %v1850
      %v1971 = vpop.f32.mrf.mxu0
      %v1972 = vadd.f32 0.0, %v1971
      %1973 = vmatmul.f32.gmra.mxu0 %v1952
      %v1974 = vpop.f32.mrf.mxu0
      %v1975 = vadd.f32 0.0, %v1974
      %1976 = vdwg.mxu0
      %v1977 = vadd.f32 %v1947, %v1972
      %v1978 = vadd.f32 %v1948, %v1975
      %v1979 = vld [vmem:[%s14] sm:$0x1]
      %v1981 = vperm.slane %v1979, 0
      %v1983 = vadd.f32 %v1977, %v1981
      %v1984 = vadd.f32 %v1978, %v1981
      %v1985 = vtanh.pop %v1983
      %v1986 = vtanh.pop %v1984
      %vm1987 = vcmask 23552
      %1988 = vst.msk [vmem:[%s543] sm:$0xff] %vm1987, %v1985
      %1989 = vst.msk [vmem:[%s543 + $0x8] sm:$0xff] %vm1987, %v1986
      %s1990 = smul.u32 2, %s32
      %p1991 = scmp.lt.s32.totalorder %s31, 1
      %s1992 = scalar_select %p1991, %s31, 1
      %p1993 = scmp.lt.s32.totalorder %s1990, 1
      %s1994 = scalar_select %p1993, %s1990, 1
      %s1995 = smul.addr %s1992, 2
      %s1996 = sadd.s32 %s1994, %s1995
      %s1997 = smul.addr %s1996, 8
      %s1998 = scalar_lea.vmem %s16, %s1997
      // Predicated region
      $region85: #{cnn1d_forward.1} parent=83 // pred_check
        %p1999 = pneg %p400
      $region86: #{cnn1d_forward.1} parent=83 // pred_check_branch
        %2001 = sbr.rel (%p1999) target = $region88
      $region87: #{cnn1d_forward.1} parent=83 // pred_region
        %s2002 = smul.u32 2, %s32
      $region88: #{cnn1d_forward.1} parent=83 // pred_fallthru
        _
    $region84: #{cnn1d_forward.1} parent=5 // pred_fallthru
      _
    %p2003 = scmp.le.s32.totalorder 2, %s22
    // Predicated region
    $region89: #{cnn1d_forward.1} parent=5 // pred_check
      %p2004 = pneg %p2003
    $region90: #{cnn1d_forward.1} parent=5 // pred_check_branch
      %2006 = sbr.rel (%p2004) target = $region92
    $region91: #{cnn1d_forward.1} parent=5 // pred_region
      %s2007 = ssub.s32 %s22, 2
      // Predicated region
      $region93: #{cnn1d_forward.1} parent=91 // pred_check
        %p2008 = pneg %p406
      $region94: #{cnn1d_forward.1} parent=91 // pred_check_branch
        %2010 = sbr.rel (%p2008) target = $region96
      $region95: #{cnn1d_forward.1} parent=91 // pred_region
        %s2011 = smul.u32 2, %s34
        %p2012 = scmp.lt.s32.totalorder %s33, 1
        %s2013 = scalar_select %p2012, %s33, 1
        %p2014 = scmp.lt.s32.totalorder %s2011, 1
        %s2015 = scalar_select %p2014, %s2011, 1
        %s2016 = smul.addr %s2013, 2
        %s2017 = sadd.s32 %s2015, %s2016
        %s2018 = smul.addr %s2017, 8
        %s2019 = scalar_lea.vmem %s16, %s2018
      $region96: #{cnn1d_forward.1} parent=91 // pred_fallthru
        _
    $region92: #{cnn1d_forward.1} parent=5 // pred_fallthru
      _
  $region6: #{cnn1d_forward.1} parent=0 // loop_footer
    %s26 = sadd.s32 1, %s22
  $region7: #{cnn1d_forward.1} parent=0 // loop_footer_branch
    %21 = sbr.rel target = $region3
  $region8: #{cnn1d_forward.1} parent=0 // loop_exit
    _

</llo_original>
